<compile_context>
chip_gen: v7x
topology: tpu7x:2x2x1
jax: 0.10.0
libtpu: 0.0.40
codegen_flags: <defaults>
</compile_context>

<pallas_src>
import jax
import jax.numpy as jnp
from jax.experimental import pallas as pl
from jax.experimental.pallas import tpu as pltpu

# ----------------------------------------------------------------------------
# MLP dimensions implied by the module
# ----------------------------------------------------------------------------
IN_F = 512
OUT_F = 32
OUT_PAD = 128                                   # lane-dense padded output width
DIMS = [IN_F, 128, 256, 512, 256, 128, OUT_F]   # 6 Linear layers, ReLU between


def _round_up(x, m):
    return pl.cdiv(x, m) * m


def _choose_tile(B, bm):
    """Batch tile: as large as possible, multiple of 16, and guaranteeing >=2
    grid tiles for large batches so both TensorCores get work on v7x."""
    bm_eff = min(bm, _round_up(B, 16))
    if B >= 512:   # only split when each half-tile still fills the MXU M dim
        bm_eff = min(bm_eff, _round_up(pl.cdiv(B, 2), 16))
    return int(bm_eff)


def mlp_kernel(x_ref,
               w1, b1, w2, b2, w3, b3, w4, b4, w5, b5, w6, b6,
               o_ref):
    """Whole 6-layer MLP for one batch tile, entirely in VMEM.

    x arrives as f32 (cast to bf16 here, fused with the DMA pipeline), weights
    are bf16 (MXU-native), accumulation / bias / ReLU in f32, re-cast to bf16
    between layers; final store is bf16 on a 128-lane padded output.
    """
    def lin_relu(h, w_ref, b_ref):
        y = jnp.dot(h, w_ref[...], preferred_element_type=jnp.float32) + b_ref[...]
        return jnp.maximum(y, 0.0).astype(jnp.bfloat16)

    h = x_ref[...].astype(jnp.bfloat16)       # in-kernel f32 -> bf16 cast
    h = lin_relu(h, w1, b1)
    h = lin_relu(h, w2, b2)
    h = lin_relu(h, w3, b3)
    h = lin_relu(h, w4, b4)
    h = lin_relu(h, w5, b5)
    # final layer: no ReLU; output block is 128-lane padded (zero-padded W6/b6)
    o_ref[...] = (jnp.dot(h, w6[...], preferred_element_type=jnp.float32)
                  + b6[...]).astype(o_ref.dtype)


def ff_neural_network3(x, params, *, bm=1024):
    """x: (B, 512) float32.  params: list of (w (in,out) f32, b (1,out) f32).

    Returns (B, 32) float32, y = relu-MLP(x) matching the PyTorch module.
    """
    B, F = x.shape
    assert F == IN_F
    n_layers = len(params)

    x = x.astype(jnp.float32)                 # no-op if already f32
    bm_eff = _choose_tile(B, bm)
    grid = (int(pl.cdiv(B, bm_eff)),)

    # Flatten params -> w1,b1,...,w6,b6; final layer zero-padded to 128 lanes.
    flat = []
    weight_specs = []
    for li, (w, b) in enumerate(params):
        w = w.astype(jnp.bfloat16)
        b = b.astype(jnp.float32)
        if li == n_layers - 1:
            w = jnp.pad(w, ((0, 0), (0, OUT_PAD - OUT_F)))
            b = jnp.pad(b, ((0, 0), (0, OUT_PAD - OUT_F)))
        flat.extend([w, b])
        # Full-array blocks with a constant index_map -> weights stay resident
        # in VMEM across the whole grid (no per-step re-DMA). Total ~0.8 MiB.
        weight_specs.append(pl.BlockSpec(w.shape, lambda i: (0, 0)))
        weight_specs.append(pl.BlockSpec(b.shape, lambda i: (0, 0)))

    # Cost estimate (helps XLA schedule the custom call).
    padded_dims = DIMS[:-1] + [OUT_PAD]
    rows = grid[0] * bm_eff
    flops = 2 * rows * sum(a * b for a, b in zip(padded_dims[:-1], padded_dims[1:]))
    weight_bytes = sum(int(t.size) * t.dtype.itemsize for t in flat)
    bytes_accessed = rows * IN_F * 4 + rows * OUT_PAD * 2 + weight_bytes

    out_full = pl.pallas_call(
        mlp_kernel,
        out_shape=jax.ShapeDtypeStruct((B, OUT_PAD), jnp.bfloat16),
        grid_spec=pltpu.PrefetchScalarGridSpec(
            num_scalar_prefetch=0,
            grid=grid,
            in_specs=[pl.BlockSpec((bm_eff, F), lambda i: (i, 0))] + weight_specs,
            out_specs=pl.BlockSpec((bm_eff, OUT_PAD), lambda i: (i, 0)),
        ),
        compiler_params=pltpu.CompilerParams(
            dimension_semantics=("parallel",),
            # Larger batch tiles need more than the 16/32 MiB default scoped
            # limit (v5e/v7x); 48 MiB is still well under v7x's 64 MiB physical.
            vmem_limit_bytes=48 * 1024 * 1024),
        cost_estimate=pl.CostEstimate(
            flops=flops, transcendentals=0, bytes_accessed=bytes_accessed),
    )(x, *flat)

    # Strip lane padding of the final layer and upcast to f32.
    return out_full[:, :OUT_F].astype(jnp.float32)


# ----------------------------------------------------------------------------
# Deterministic parameter init (PyTorch nn.Linear style: U(-1/sqrt(in), +1/sqrt(in)))
# ----------------------------------------------------------------------------
def init_params(key):
    params = []
    for li in range(len(DIMS) - 1):
        fan_in, fan_out = DIMS[li], DIMS[li + 1]
        key, kw, kb = jax.random.split(key, 3)
        bound = 1.0 / jnp.sqrt(fan_in)
        w = jax.random.uniform(kw, (fan_in, fan_out), jnp.float32, -bound, bound)
        b = jax.random.uniform(kb, (1, fan_out), jnp.float32, -bound, bound)
        params.append((w, b))
    return params


def reference_forward_f32(x, params):
    h = x
    for i, (w, b) in enumerate(params):
        h = h @ w + b
        if i < len(params) - 1:
            h = jnp.maximum(h, 0.0)
    return h


def reference_forward_bf16(x, params):
    """Dtype-matched reference: bf16 matmuls, f32 accumulation / bias / ReLU."""
    h = x.astype(jnp.bfloat16)
    for i, (w, b) in enumerate(params):
        h = jnp.dot(h, w.astype(jnp.bfloat16),
                    preferred_element_type=jnp.float32) + b.astype(jnp.float32)
        if i < len(params) - 1:
            h = jnp.maximum(h, 0.0).astype(jnp.bfloat16)
    return h


if __name__ == "__main__":
    key = jax.random.PRNGKey(0)
    kx, kp = jax.random.split(key)

    B = 16
    x = jax.random.normal(kx, (B, IN_F), dtype=jnp.float32)
    params = init_params(kp)

    out = jax.block_until_ready(ff_neural_network3(x, params))

    ref_bf16 = reference_forward_bf16(x, params)
    ref_f32 = reference_forward_f32(x, params)

    assert out.shape == (B, OUT_F), out.shape
    # Check against the dtype-matched reference (kernel output is stored as
    # bf16, so allow a final-rounding ulp on top of matched bf16 matmul math).
    assert jnp.allclose(out, ref_bf16, atol=1e-2, rtol=1e-2), "mismatch vs bf16 reference"
    # Loose check against the full-f32 (PyTorch-equivalent) reference.
    assert jnp.allclose(out, ref_f32, atol=5e-2, rtol=5e-2), "mismatch vs f32 reference"
    print("KERNEL_OK")
</pallas_src>

<mosaic_0001>
module attributes {stable_mosaic.version = 11 : i64} {
  func.func @mlp_kernel(%arg0: i32, %arg1: memref<16x512xf32, #tpu.memory_space<vmem>>, %arg2: memref<512x128xbf16, #tpu.memory_space<vmem>>, %arg3: memref<1x128xf32, #tpu.memory_space<vmem>>, %arg4: memref<128x256xbf16, #tpu.memory_space<vmem>>, %arg5: memref<1x256xf32, #tpu.memory_space<vmem>>, %arg6: memref<256x512xbf16, #tpu.memory_space<vmem>>, %arg7: memref<1x512xf32, #tpu.memory_space<vmem>>, %arg8: memref<512x256xbf16, #tpu.memory_space<vmem>>, %arg9: memref<1x256xf32, #tpu.memory_space<vmem>>, %arg10: memref<256x128xbf16, #tpu.memory_space<vmem>>, %arg11: memref<1x128xf32, #tpu.memory_space<vmem>>, %arg12: memref<128x128xbf16, #tpu.memory_space<vmem>>, %arg13: memref<1x128xf32, #tpu.memory_space<vmem>>, %arg14: memref<16x128xbf16, #tpu.memory_space<vmem>>) attributes {dimension_semantics = [#tpu.dimension_semantics<parallel>], iteration_bounds = array<i64: 1>, scalar_prefetch = 0 : i64, scratch_operands = 0 : i64, tpu.core_type = #tpu.core_type<tc>, window_params = [{transform_indices = @transform_0, window_bounds = array<i64: 16, 512>}, {pipeline_mode = #tpu.pipeline_mode<synchronous>, transform_indices = @transform_1, window_bounds = array<i64: 512, 128>}, {pipeline_mode = #tpu.pipeline_mode<synchronous>, transform_indices = @transform_2, window_bounds = array<i64: 1, 128>}, {pipeline_mode = #tpu.pipeline_mode<synchronous>, transform_indices = @transform_3, window_bounds = array<i64: 128, 256>}, {pipeline_mode = #tpu.pipeline_mode<synchronous>, transform_indices = @transform_4, window_bounds = array<i64: 1, 256>}, {pipeline_mode = #tpu.pipeline_mode<synchronous>, transform_indices = @transform_5, window_bounds = array<i64: 256, 512>}, {pipeline_mode = #tpu.pipeline_mode<synchronous>, transform_indices = @transform_6, window_bounds = array<i64: 1, 512>}, {pipeline_mode = #tpu.pipeline_mode<synchronous>, transform_indices = @transform_7, window_bounds = array<i64: 512, 256>}, {pipeline_mode = #tpu.pipeline_mode<synchronous>, transform_indices = @transform_8, window_bounds = array<i64: 1, 256>}, {pipeline_mode = #tpu.pipeline_mode<synchronous>, transform_indices = @transform_9, window_bounds = array<i64: 256, 128>}, {pipeline_mode = #tpu.pipeline_mode<synchronous>, transform_indices = @transform_10, window_bounds = array<i64: 1, 128>}, {pipeline_mode = #tpu.pipeline_mode<synchronous>, transform_indices = @transform_11, window_bounds = array<i64: 128, 128>}, {pipeline_mode = #tpu.pipeline_mode<synchronous>, transform_indices = @transform_12, window_bounds = array<i64: 1, 128>}, {transform_indices = @transform_13, window_bounds = array<i64: 16, 128>}]} {
    %c0 = arith.constant 0 : index
    %c0_0 = arith.constant 0 : index
    %0 = vector.load %arg1[%c0, %c0_0] : memref<16x512xf32, #tpu.memory_space<vmem>>, vector<16x512xf32>
    %1 = arith.truncf %0 : vector<16x512xf32> to vector<16x512xbf16>
    %c0_1 = arith.constant 0 : index
    %c0_2 = arith.constant 0 : index
    %2 = vector.load %arg2[%c0_1, %c0_2] : memref<512x128xbf16, #tpu.memory_space<vmem>>, vector<512x128xbf16>
    %cst = arith.constant dense<0.000000e+00> : vector<16x128xf32>
    %3 = tpu.matmul %1, %2, %cst {dimension_numbers = #tpu.dot_dimension_numbers<[1], [0], [0], [1], [0, 0, 1, 1], [], []>} : vector<16x512xbf16>, vector<512x128xbf16>, vector<16x128xf32> -> vector<16x128xf32>
    %c0_3 = arith.constant 0 : index
    %c0_4 = arith.constant 0 : index
    %4 = vector.load %arg3[%c0_3, %c0_4] : memref<1x128xf32, #tpu.memory_space<vmem>>, vector<1x128xf32>
    %5 = vector.broadcast %4 : vector<1x128xf32> to vector<16x128xf32>
    %6 = arith.addf %3, %5 : vector<16x128xf32>
    %cst_5 = arith.constant 0.000000e+00 : f32
    %7 = vector.broadcast %cst_5 : f32 to vector<16x128xf32>
    %8 = arith.maximumf %6, %7 : vector<16x128xf32>
    %9 = arith.truncf %8 : vector<16x128xf32> to vector<16x128xbf16>
    %c0_6 = arith.constant 0 : index
    %c0_7 = arith.constant 0 : index
    %10 = vector.load %arg4[%c0_6, %c0_7] : memref<128x256xbf16, #tpu.memory_space<vmem>>, vector<128x256xbf16>
    %cst_8 = arith.constant dense<0.000000e+00> : vector<16x256xf32>
    %11 = tpu.matmul %9, %10, %cst_8 {dimension_numbers = #tpu.dot_dimension_numbers<[1], [0], [0], [1], [0, 0, 1, 1], [], []>} : vector<16x128xbf16>, vector<128x256xbf16>, vector<16x256xf32> -> vector<16x256xf32>
    %c0_9 = arith.constant 0 : index
    %c0_10 = arith.constant 0 : index
    %12 = vector.load %arg5[%c0_9, %c0_10] : memref<1x256xf32, #tpu.memory_space<vmem>>, vector<1x256xf32>
    %13 = vector.broadcast %12 : vector<1x256xf32> to vector<16x256xf32>
    %14 = arith.addf %11, %13 : vector<16x256xf32>
    %cst_11 = arith.constant 0.000000e+00 : f32
    %15 = vector.broadcast %cst_11 : f32 to vector<16x256xf32>
    %16 = arith.maximumf %14, %15 : vector<16x256xf32>
    %17 = arith.truncf %16 : vector<16x256xf32> to vector<16x256xbf16>
    %c0_12 = arith.constant 0 : index
    %c0_13 = arith.constant 0 : index
    %18 = vector.load %arg6[%c0_12, %c0_13] : memref<256x512xbf16, #tpu.memory_space<vmem>>, vector<256x512xbf16>
    %cst_14 = arith.constant dense<0.000000e+00> : vector<16x512xf32>
    %19 = tpu.matmul %17, %18, %cst_14 {dimension_numbers = #tpu.dot_dimension_numbers<[1], [0], [0], [1], [0, 0, 1, 1], [], []>} : vector<16x256xbf16>, vector<256x512xbf16>, vector<16x512xf32> -> vector<16x512xf32>
    %c0_15 = arith.constant 0 : index
    %c0_16 = arith.constant 0 : index
    %20 = vector.load %arg7[%c0_15, %c0_16] : memref<1x512xf32, #tpu.memory_space<vmem>>, vector<1x512xf32>
    %21 = vector.broadcast %20 : vector<1x512xf32> to vector<16x512xf32>
    %22 = arith.addf %19, %21 : vector<16x512xf32>
    %cst_17 = arith.constant 0.000000e+00 : f32
    %23 = vector.broadcast %cst_17 : f32 to vector<16x512xf32>
    %24 = arith.maximumf %22, %23 : vector<16x512xf32>
    %25 = arith.truncf %24 : vector<16x512xf32> to vector<16x512xbf16>
    %c0_18 = arith.constant 0 : index
    %c0_19 = arith.constant 0 : index
    %26 = vector.load %arg8[%c0_18, %c0_19] : memref<512x256xbf16, #tpu.memory_space<vmem>>, vector<512x256xbf16>
    %cst_20 = arith.constant dense<0.000000e+00> : vector<16x256xf32>
    %27 = tpu.matmul %25, %26, %cst_20 {dimension_numbers = #tpu.dot_dimension_numbers<[1], [0], [0], [1], [0, 0, 1, 1], [], []>} : vector<16x512xbf16>, vector<512x256xbf16>, vector<16x256xf32> -> vector<16x256xf32>
    %c0_21 = arith.constant 0 : index
    %c0_22 = arith.constant 0 : index
    %28 = vector.load %arg9[%c0_21, %c0_22] : memref<1x256xf32, #tpu.memory_space<vmem>>, vector<1x256xf32>
    %29 = vector.broadcast %28 : vector<1x256xf32> to vector<16x256xf32>
    %30 = arith.addf %27, %29 : vector<16x256xf32>
    %cst_23 = arith.constant 0.000000e+00 : f32
    %31 = vector.broadcast %cst_23 : f32 to vector<16x256xf32>
    %32 = arith.maximumf %30, %31 : vector<16x256xf32>
    %33 = arith.truncf %32 : vector<16x256xf32> to vector<16x256xbf16>
    %c0_24 = arith.constant 0 : index
    %c0_25 = arith.constant 0 : index
    %34 = vector.load %arg10[%c0_24, %c0_25] : memref<256x128xbf16, #tpu.memory_space<vmem>>, vector<256x128xbf16>
    %cst_26 = arith.constant dense<0.000000e+00> : vector<16x128xf32>
    %35 = tpu.matmul %33, %34, %cst_26 {dimension_numbers = #tpu.dot_dimension_numbers<[1], [0], [0], [1], [0, 0, 1, 1], [], []>} : vector<16x256xbf16>, vector<256x128xbf16>, vector<16x128xf32> -> vector<16x128xf32>
    %c0_27 = arith.constant 0 : index
    %c0_28 = arith.constant 0 : index
    %36 = vector.load %arg11[%c0_27, %c0_28] : memref<1x128xf32, #tpu.memory_space<vmem>>, vector<1x128xf32>
    %37 = vector.broadcast %36 : vector<1x128xf32> to vector<16x128xf32>
    %38 = arith.addf %35, %37 : vector<16x128xf32>
    %cst_29 = arith.constant 0.000000e+00 : f32
    %39 = vector.broadcast %cst_29 : f32 to vector<16x128xf32>
    %40 = arith.maximumf %38, %39 : vector<16x128xf32>
    %41 = arith.truncf %40 : vector<16x128xf32> to vector<16x128xbf16>
    %c0_30 = arith.constant 0 : index
    %c0_31 = arith.constant 0 : index
    %42 = vector.load %arg12[%c0_30, %c0_31] : memref<128x128xbf16, #tpu.memory_space<vmem>>, vector<128x128xbf16>
    %cst_32 = arith.constant dense<0.000000e+00> : vector<16x128xf32>
    %43 = tpu.matmul %41, %42, %cst_32 {dimension_numbers = #tpu.dot_dimension_numbers<[1], [0], [0], [1], [0, 0, 1, 1], [], []>} : vector<16x128xbf16>, vector<128x128xbf16>, vector<16x128xf32> -> vector<16x128xf32>
    %c0_33 = arith.constant 0 : index
    %c0_34 = arith.constant 0 : index
    %44 = vector.load %arg13[%c0_33, %c0_34] : memref<1x128xf32, #tpu.memory_space<vmem>>, vector<1x128xf32>
    %45 = vector.broadcast %44 : vector<1x128xf32> to vector<16x128xf32>
    %46 = arith.addf %43, %45 : vector<16x128xf32>
    %47 = arith.truncf %46 : vector<16x128xf32> to vector<16x128xbf16>
    %c0_35 = arith.constant 0 : index
    %c0_36 = arith.constant 0 : index
    %48 = vector.load %arg14[%c0_35, %c0_36] : memref<16x128xbf16, #tpu.memory_space<vmem>>, vector<16x128xbf16>
    tpu.vector_store %arg14[%c0_35, %c0_36], %47 {strides = array<i32>} : memref<16x128xbf16, #tpu.memory_space<vmem>>, vector<16x128xbf16>,
    return
  }
  func.func @transform_0(%arg0: i32) -> (i32, i32) {
    %c0_i32 = arith.constant 0 : i32
    %c0_i32_0 = arith.constant 0 : i32
    return %arg0, %c0_i32 : i32, i32
  }
  func.func @transform_1(%arg0: i32) -> (i32, i32) {
    %c0_i32 = arith.constant 0 : i32
    %c0_i32_0 = arith.constant 0 : i32
    %c0_i32_1 = arith.constant 0 : i32
    return %c0_i32, %c0_i32_0 : i32, i32
  }
  func.func @transform_2(%arg0: i32) -> (i32, i32) {
    %c0_i32 = arith.constant 0 : i32
    %c0_i32_0 = arith.constant 0 : i32
    %c0_i32_1 = arith.constant 0 : i32
    return %c0_i32, %c0_i32_0 : i32, i32
  }
  func.func @transform_3(%arg0: i32) -> (i32, i32) {
    %c0_i32 = arith.constant 0 : i32
    %c0_i32_0 = arith.constant 0 : i32
    %c0_i32_1 = arith.constant 0 : i32
    return %c0_i32, %c0_i32_0 : i32, i32
  }
  func.func @transform_4(%arg0: i32) -> (i32, i32) {
    %c0_i32 = arith.constant 0 : i32
    %c0_i32_0 = arith.constant 0 : i32
    %c0_i32_1 = arith.constant 0 : i32
    return %c0_i32, %c0_i32_0 : i32, i32
  }
  func.func @transform_5(%arg0: i32) -> (i32, i32) {
    %c0_i32 = arith.constant 0 : i32
    %c0_i32_0 = arith.constant 0 : i32
    %c0_i32_1 = arith.constant 0 : i32
    return %c0_i32, %c0_i32_0 : i32, i32
  }
  func.func @transform_6(%arg0: i32) -> (i32, i32) {
    %c0_i32 = arith.constant 0 : i32
    %c0_i32_0 = arith.constant 0 : i32
    %c0_i32_1 = arith.constant 0 : i32
    return %c0_i32, %c0_i32_0 : i32, i32
  }
  func.func @transform_7(%arg0: i32) -> (i32, i32) {
    %c0_i32 = arith.constant 0 : i32
    %c0_i32_0 = arith.constant 0 : i32
    %c0_i32_1 = arith.constant 0 : i32
    return %c0_i32, %c0_i32_0 : i32, i32
  }
  func.func @transform_8(%arg0: i32) -> (i32, i32) {
    %c0_i32 = arith.constant 0 : i32
    %c0_i32_0 = arith.constant 0 : i32
    %c0_i32_1 = arith.constant 0 : i32
    return %c0_i32, %c0_i32_0 : i32, i32
  }
  func.func @transform_9(%arg0: i32) -> (i32, i32) {
    %c0_i32 = arith.constant 0 : i32
    %c0_i32_0 = arith.constant 0 : i32
    %c0_i32_1 = arith.constant 0 : i32
    return %c0_i32, %c0_i32_0 : i32, i32
  }
  func.func @transform_10(%arg0: i32) -> (i32, i32) {
    %c0_i32 = arith.constant 0 : i32
    %c0_i32_0 = arith.constant 0 : i32
    %c0_i32_1 = arith.constant 0 : i32
    return %c0_i32, %c0_i32_0 : i32, i32
  }
  func.func @transform_11(%arg0: i32) -> (i32, i32) {
    %c0_i32 = arith.constant 0 : i32
    %c0_i32_0 = arith.constant 0 : i32
    %c0_i32_1 = arith.constant 0 : i32
    return %c0_i32, %c0_i32_0 : i32, i32
  }
  func.func @transform_12(%arg0: i32) -> (i32, i32) {
    %c0_i32 = arith.constant 0 : i32
    %c0_i32_0 = arith.constant 0 : i32
    %c0_i32_1 = arith.constant 0 : i32
    return %c0_i32, %c0_i32_0 : i32, i32
  }
  func.func @transform_13(%arg0: i32) -> (i32, i32) {
    %c0_i32 = arith.constant 0 : i32
    %c0_i32_0 = arith.constant 0 : i32
    return %arg0, %c0_i32 : i32, i32
  }
}

</mosaic_0001>

<llo_original>
// kernel: tpu_custom_call.1
$region0: #{tpu_custom_call.1}
  #allocation0 [shape = 'u32[]', space=smem, size = 0x4, offset = 0x4, fixed_abs, tag = 'smem constant byte address 0x4 - core index']
  #allocation1 [shape = 'u32[144,128]{1,0:T(1,128)}', space=vmem, size = 0x12000, scoped, tag = 'internal scratch']
  %s0 = inlined_call_operand.hbm [shape: f32[16,512], index: 0, kind: input, shape index: {}]
  %s1 = inlined_call_operand.hbm [shape: bf16[512,128], index: 1, kind: input, shape index: {}]
  %s2 = inlined_call_operand.vmem [shape: f32[1,128], index: 2, kind: input, shape index: {}]
  %s3 = inlined_call_operand.hbm [shape: bf16[128,256], index: 3, kind: input, shape index: {}]
  %s4 = inlined_call_operand.vmem [shape: f32[1,256], index: 4, kind: input, shape index: {}]
  %s5 = inlined_call_operand.hbm [shape: bf16[256,512], index: 5, kind: input, shape index: {}]
  %s6 = inlined_call_operand.vmem [shape: f32[1,512], index: 6, kind: input, shape index: {}]
  %s7 = inlined_call_operand.hbm [shape: bf16[512,256], index: 7, kind: input, shape index: {}]
  %s8 = inlined_call_operand.vmem [shape: f32[1,256], index: 8, kind: input, shape index: {}]
  %s9 = inlined_call_operand.hbm [shape: bf16[256,128], index: 9, kind: input, shape index: {}]
  %s10 = inlined_call_operand.vmem [shape: f32[1,128], index: 10, kind: input, shape index: {}]
  %s11 = inlined_call_operand.hbm [shape: bf16[128,128], index: 11, kind: input, shape index: {}]
  %s12 = inlined_call_operand.vmem [shape: f32[1,128], index: 12, kind: input, shape index: {}]
  %s13 = inlined_call_operand.hbm [shape: bf16[16,128], index: 13, kind: output, shape index: {}]
  %s14 = sld [smem:[#allocation0]]
  $region90: #{tpu_custom_call.1} parent=0
    _
  %s16 = ssub.s32 1, %s14
  %s17 = scalar_select 0, %s16, %s14
  $region1: #{tpu_custom_call.1} parent=0
    #allocation2 [shape = 'u8[32768]{0}', space=vmem, size = 0x8000, scoped, tag = 'input window, operand 0, single buffered']
    #allocation3 [shape = 's32[1]{0}', space=sflag, size = 0x4, scoped, tag = 'scoped memory for tpu_custom_call.1']
    #allocation4 [shape = 's32[1]{0}', space=sflag, size = 0x4, scoped, tag = 'scoped memory for tpu_custom_call.1']
    #allocation5 [shape = 'u8[131072]{0}', space=vmem, size = 0x20000, scoped, tag = 'input window, operand 1, single buffered']
    #allocation6 [shape = 's32[1]{0}', space=sflag, size = 0x4, scoped, tag = 'scoped memory for tpu_custom_call.1']
    #allocation7 [shape = 'u8[65536]{0}', space=vmem, size = 0x10000, scoped, tag = 'input window, operand 3, single buffered']
    #allocation8 [shape = 'u8[262144]{0}', space=vmem, size = 0x40000, scoped, tag = 'input window, operand 5, single buffered']
    #allocation9 [shape = 's32[1]{0}', space=sflag, size = 0x4, scoped, tag = 'scoped memory for tpu_custom_call.1']
    #allocation10 [shape = 'u8[262144]{0}', space=vmem, size = 0x40000, scoped, tag = 'input window, operand 7, single buffered']
    #allocation11 [shape = 'u8[65536]{0}', space=vmem, size = 0x10000, scoped, tag = 'input window, operand 9, single buffered']
    #allocation12 [shape = 's32[1]{0}', space=sflag, size = 0x4, scoped, tag = 'scoped memory for tpu_custom_call.1']
    #allocation13 [shape = 'u8[32768]{0}', space=vmem, size = 0x8000, scoped, tag = 'input window, operand 11, single buffered']
    #allocation14 [shape = 'u8[4096]{0}', space=vmem, size = 0x1000, scoped, tag = 'output window, operand 0, single buffered']
    %18 = vsyncpa [#allocation3], 0
    %19 = vsyncpa [#allocation6], 0
    %20 = vsyncpa [#allocation9], 0
    %21 = vsyncpa [#allocation12], 0
    %22 = vsyncpa [#allocation4], 0
    // Predicated region
    $region2: #{tpu_custom_call.1} parent=1 // pred_check
      _
    $region3: #{tpu_custom_call.1} parent=1 // pred_check_branch
      %24 = sbr.rel (0) target = $region5
    $region4: #{tpu_custom_call.1} parent=1 // pred_region
      %s26 = ssub.s32 1024, 1024
      %27 = vsyncadd [#allocation3], %s26
      %s28 = sshll.u32 [#allocation2], 4
      %s29 = int_to_ptr.vmem [resolvable:$true] %s28
      %34 = dma.hbm_to_vmem [thread:$0]  %s0, 1024, %s29, [#allocation3], 512, 512, 32
    $region5: #{tpu_custom_call.1} parent=1 // pred_fallthru
      _
    // Predicated region
    $region6: #{tpu_custom_call.1} parent=1 // pred_check
      _
    $region7: #{tpu_custom_call.1} parent=1 // pred_check_branch
      %36 = sbr.rel (0) target = $region9
    $region8: #{tpu_custom_call.1} parent=1 // pred_region
      %s38 = ssub.s32 4096, 4096
      %39 = vsyncadd [#allocation6], %s38
      %s40 = sshll.u32 [#allocation5], 4
      %s41 = int_to_ptr.vmem [resolvable:$true] %s40
      %46 = dma.hbm_to_vmem [thread:$0]  %s1, 4096, %s41, [#allocation6], 64, 64, 4
    $region9: #{tpu_custom_call.1} parent=1 // pred_fallthru
      _
    // Predicated region
    $region10: #{tpu_custom_call.1} parent=1 // pred_check
      _
    $region11: #{tpu_custom_call.1} parent=1 // pred_check_branch
      %48 = sbr.rel (0) target = $region13
    $region12: #{tpu_custom_call.1} parent=1 // pred_region
      _
    $region13: #{tpu_custom_call.1} parent=1 // pred_fallthru
      _
    // Predicated region
    $region14: #{tpu_custom_call.1} parent=1 // pred_check
      _
    $region15: #{tpu_custom_call.1} parent=1 // pred_check_branch
      %50 = sbr.rel (0) target = $region17
    $region16: #{tpu_custom_call.1} parent=1 // pred_region
      %s52 = ssub.s32 2048, 2048
      %53 = vsyncadd [#allocation6], %s52
      %s54 = sshll.u32 [#allocation7], 4
      %s55 = int_to_ptr.vmem [resolvable:$true] %s54
      %60 = dma.hbm_to_vmem [thread:$0]  %s3, 2048, %s55, [#allocation6], 128, 128, 8
    $region17: #{tpu_custom_call.1} parent=1 // pred_fallthru
      _
    // Predicated region
    $region18: #{tpu_custom_call.1} parent=1 // pred_check
      _
    $region19: #{tpu_custom_call.1} parent=1 // pred_check_branch
      %62 = sbr.rel (0) target = $region21
    $region20: #{tpu_custom_call.1} parent=1 // pred_region
      _
    $region21: #{tpu_custom_call.1} parent=1 // pred_fallthru
      _
    // Predicated region
    $region22: #{tpu_custom_call.1} parent=1 // pred_check
      _
    $region23: #{tpu_custom_call.1} parent=1 // pred_check_branch
      %64 = sbr.rel (0) target = $region25
    $region24: #{tpu_custom_call.1} parent=1 // pred_region
      %s66 = ssub.s32 8192, 8192
      %67 = vsyncadd [#allocation9], %s66
      %s68 = sshll.u32 [#allocation8], 4
      %s69 = int_to_ptr.vmem [resolvable:$true] %s68
      %74 = dma.hbm_to_vmem [thread:$0]  %s5, 8192, %s69, [#allocation9], 256, 256, 16
    $region25: #{tpu_custom_call.1} parent=1 // pred_fallthru
      _
    // Predicated region
    $region26: #{tpu_custom_call.1} parent=1 // pred_check
      _
    $region27: #{tpu_custom_call.1} parent=1 // pred_check_branch
      %76 = sbr.rel (0) target = $region29
    $region28: #{tpu_custom_call.1} parent=1 // pred_region
      _
    $region29: #{tpu_custom_call.1} parent=1 // pred_fallthru
      _
    // Predicated region
    $region30: #{tpu_custom_call.1} parent=1 // pred_check
      _
    $region31: #{tpu_custom_call.1} parent=1 // pred_check_branch
      %78 = sbr.rel (0) target = $region33
    $region32: #{tpu_custom_call.1} parent=1 // pred_region
      %s80 = ssub.s32 8192, 8192
      %81 = vsyncadd [#allocation9], %s80
      %s82 = sshll.u32 [#allocation10], 4
      %s83 = int_to_ptr.vmem [resolvable:$true] %s82
      %88 = dma.hbm_to_vmem [thread:$0]  %s7, 8192, %s83, [#allocation9], 128, 128, 8
    $region33: #{tpu_custom_call.1} parent=1 // pred_fallthru
      _
    // Predicated region
    $region34: #{tpu_custom_call.1} parent=1 // pred_check
      _
    $region35: #{tpu_custom_call.1} parent=1 // pred_check_branch
      %90 = sbr.rel (0) target = $region37
    $region36: #{tpu_custom_call.1} parent=1 // pred_region
      _
    $region37: #{tpu_custom_call.1} parent=1 // pred_fallthru
      _
    // Predicated region
    $region38: #{tpu_custom_call.1} parent=1 // pred_check
      _
    $region39: #{tpu_custom_call.1} parent=1 // pred_check_branch
      %92 = sbr.rel (0) target = $region41
    $region40: #{tpu_custom_call.1} parent=1 // pred_region
      %s94 = ssub.s32 2048, 2048
      %95 = vsyncadd [#allocation12], %s94
      %s96 = sshll.u32 [#allocation11], 4
      %s97 = int_to_ptr.vmem [resolvable:$true] %s96
      %102 = dma.hbm_to_vmem [thread:$0]  %s9, 2048, %s97, [#allocation12], 64, 64, 4
    $region41: #{tpu_custom_call.1} parent=1 // pred_fallthru
      _
    // Predicated region
    $region42: #{tpu_custom_call.1} parent=1 // pred_check
      _
    $region43: #{tpu_custom_call.1} parent=1 // pred_check_branch
      %104 = sbr.rel (0) target = $region45
    $region44: #{tpu_custom_call.1} parent=1 // pred_region
      _
    $region45: #{tpu_custom_call.1} parent=1 // pred_fallthru
      _
    // Predicated region
    $region46: #{tpu_custom_call.1} parent=1 // pred_check
      _
    $region47: #{tpu_custom_call.1} parent=1 // pred_check_branch
      %106 = sbr.rel (0) target = $region49
    $region48: #{tpu_custom_call.1} parent=1 // pred_region
      %s108 = ssub.s32 1024, 1024
      %109 = vsyncadd [#allocation12], %s108
      %s110 = sshll.u32 [#allocation13], 4
      %s111 = int_to_ptr.vmem [resolvable:$true] %s110
      %116 = dma.hbm_to_vmem [thread:$0]  %s11, 1024, %s111, [#allocation12], 64, 64, 4
    $region49: #{tpu_custom_call.1} parent=1 // pred_fallthru
      _
    // Predicated region
    $region50: #{tpu_custom_call.1} parent=1 // pred_check
      _
    $region51: #{tpu_custom_call.1} parent=1 // pred_check_branch
      %118 = sbr.rel (0) target = $region53
    $region52: #{tpu_custom_call.1} parent=1 // pred_region
      _
    $region53: #{tpu_custom_call.1} parent=1 // pred_fallthru
      _
    // Predicated region
    $region54: #{tpu_custom_call.1} parent=1 // pred_check
      _
    $region55: #{tpu_custom_call.1} parent=1 // pred_check_branch
      %120 = sbr.rel (0) target = $region57
    $region56: #{tpu_custom_call.1} parent=1 // pred_region
      %121 = dma.done [#allocation3], 1024
    $region57: #{tpu_custom_call.1} parent=1 // pred_fallthru
      _
    // Predicated region
    $region58: #{tpu_custom_call.1} parent=1 // pred_check
      _
    $region59: #{tpu_custom_call.1} parent=1 // pred_check_branch
      %123 = sbr.rel (0) target = $region61
    $region60: #{tpu_custom_call.1} parent=1 // pred_region
      %124 = dma.done [#allocation6], 4096
    $region61: #{tpu_custom_call.1} parent=1 // pred_fallthru
      _
    // Predicated region
    $region62: #{tpu_custom_call.1} parent=1 // pred_check
      _
    $region63: #{tpu_custom_call.1} parent=1 // pred_check_branch
      %126 = sbr.rel (0) target = $region65
    $region64: #{tpu_custom_call.1} parent=1 // pred_region
      %127 = dma.done [#allocation6], 2048
    $region65: #{tpu_custom_call.1} parent=1 // pred_fallthru
      _
    // Predicated region
    $region66: #{tpu_custom_call.1} parent=1 // pred_check
      _
    $region67: #{tpu_custom_call.1} parent=1 // pred_check_branch
      %129 = sbr.rel (0) target = $region69
    $region68: #{tpu_custom_call.1} parent=1 // pred_region
      %130 = dma.done [#allocation9], 8192
    $region69: #{tpu_custom_call.1} parent=1 // pred_fallthru
      _
    // Predicated region
    $region70: #{tpu_custom_call.1} parent=1 // pred_check
      _
    $region71: #{tpu_custom_call.1} parent=1 // pred_check_branch
      %132 = sbr.rel (0) target = $region73
    $region72: #{tpu_custom_call.1} parent=1 // pred_region
      %133 = dma.done [#allocation9], 8192
    $region73: #{tpu_custom_call.1} parent=1 // pred_fallthru
      _
    // Predicated region
    $region74: #{tpu_custom_call.1} parent=1 // pred_check
      _
    $region75: #{tpu_custom_call.1} parent=1 // pred_check_branch
      %135 = sbr.rel (0) target = $region77
    $region76: #{tpu_custom_call.1} parent=1 // pred_region
      %136 = dma.done [#allocation12], 2048
    $region77: #{tpu_custom_call.1} parent=1 // pred_fallthru
      _
    // Predicated region
    $region78: #{tpu_custom_call.1} parent=1 // pred_check
      _
    $region79: #{tpu_custom_call.1} parent=1 // pred_check_branch
      %138 = sbr.rel (0) target = $region81
    $region80: #{tpu_custom_call.1} parent=1 // pred_region
      %139 = dma.done [#allocation12], 1024
    $region81: #{tpu_custom_call.1} parent=1 // pred_fallthru
      _
    %v141 = vld [vmem:[#allocation2] sm:$0xff]
    %v142 = vld [vmem:[#allocation2 + $0x8] sm:$0xff]
    %v143 = vld [vmem:[#allocation2 + $0x10] sm:$0xff]
    %v144 = vld [vmem:[#allocation2 + $0x18] sm:$0xff]
    %v145 = vld [vmem:[#allocation2 + $0x20] sm:$0xff]
    %v146 = vld [vmem:[#allocation2 + $0x28] sm:$0xff]
    %v147 = vld [vmem:[#allocation2 + $0x30] sm:$0xff]
    %v148 = vld [vmem:[#allocation2 + $0x38] sm:$0xff]
    %v149 = vpack.c.bf16 %v145, %v141
    %v150 = vpack.c.bf16 %v146, %v142
    %v151 = vpack.c.bf16 %v147, %v143
    %v152 = vpack.c.bf16 %v148, %v144
    %v153 = vld [vmem:[#allocation5] sm:$0xf]
    %v154 = vld [vmem:[#allocation5 + $0x4] sm:$0xf]
    %v155 = vld [vmem:[#allocation5 + $0x8] sm:$0xf]
    %v156 = vld [vmem:[#allocation5 + $0xc] sm:$0xf]
    %v157 = vld [vmem:[#allocation5 + $0x10] sm:$0xf]
    %v158 = vld [vmem:[#allocation5 + $0x14] sm:$0xf]
    %v159 = vld [vmem:[#allocation5 + $0x18] sm:$0xf]
    %v160 = vld [vmem:[#allocation5 + $0x1c] sm:$0xf]
    %v161 = vld [vmem:[#allocation5 + $0x20] sm:$0xf]
    %v162 = vld [vmem:[#allocation5 + $0x24] sm:$0xf]
    %v163 = vld [vmem:[#allocation5 + $0x28] sm:$0xf]
    %v164 = vld [vmem:[#allocation5 + $0x2c] sm:$0xf]
    %v165 = vld [vmem:[#allocation5 + $0x30] sm:$0xf]
    %v166 = vld [vmem:[#allocation5 + $0x34] sm:$0xf]
    %v167 = vld [vmem:[#allocation5 + $0x38] sm:$0xf]
    %v168 = vld [vmem:[#allocation5 + $0x3c] sm:$0xf]
    %v169 = vld [vmem:[#allocation5 + $0x40] sm:$0xf]
    %v170 = vld [vmem:[#allocation5 + $0x44] sm:$0xf]
    %v171 = vld [vmem:[#allocation5 + $0x48] sm:$0xf]
    %v172 = vld [vmem:[#allocation5 + $0x4c] sm:$0xf]
    %v173 = vld [vmem:[#allocation5 + $0x50] sm:$0xf]
    %v174 = vld [vmem:[#allocation5 + $0x54] sm:$0xf]
    %v175 = vld [vmem:[#allocation5 + $0x58] sm:$0xf]
    %v176 = vld [vmem:[#allocation5 + $0x5c] sm:$0xf]
    %v177 = vld [vmem:[#allocation5 + $0x60] sm:$0xf]
    %v178 = vld [vmem:[#allocation5 + $0x64] sm:$0xf]
    %v179 = vld [vmem:[#allocation5 + $0x68] sm:$0xf]
    %v180 = vld [vmem:[#allocation5 + $0x6c] sm:$0xf]
    %v181 = vld [vmem:[#allocation5 + $0x70] sm:$0xf]
    %v182 = vld [vmem:[#allocation5 + $0x74] sm:$0xf]
    %v183 = vld [vmem:[#allocation5 + $0x78] sm:$0xf]
    %v184 = vld [vmem:[#allocation5 + $0x7c] sm:$0xf]
    %v185 = vld [vmem:[#allocation5 + $0x80] sm:$0xf]
    %v186 = vld [vmem:[#allocation5 + $0x84] sm:$0xf]
    %v187 = vld [vmem:[#allocation5 + $0x88] sm:$0xf]
    %v188 = vld [vmem:[#allocation5 + $0x8c] sm:$0xf]
    %v189 = vld [vmem:[#allocation5 + $0x90] sm:$0xf]
    %v190 = vld [vmem:[#allocation5 + $0x94] sm:$0xf]
    %v191 = vld [vmem:[#allocation5 + $0x98] sm:$0xf]
    %v192 = vld [vmem:[#allocation5 + $0x9c] sm:$0xf]
    %v193 = vld [vmem:[#allocation5 + $0xa0] sm:$0xf]
    %v194 = vld [vmem:[#allocation5 + $0xa4] sm:$0xf]
    %v195 = vld [vmem:[#allocation5 + $0xa8] sm:$0xf]
    %v196 = vld [vmem:[#allocation5 + $0xac] sm:$0xf]
    %v197 = vld [vmem:[#allocation5 + $0xb0] sm:$0xf]
    %v198 = vld [vmem:[#allocation5 + $0xb4] sm:$0xf]
    %v199 = vld [vmem:[#allocation5 + $0xb8] sm:$0xf]
    %v200 = vld [vmem:[#allocation5 + $0xbc] sm:$0xf]
    %v201 = vld [vmem:[#allocation5 + $0xc0] sm:$0xf]
    %v202 = vld [vmem:[#allocation5 + $0xc4] sm:$0xf]
    %v203 = vld [vmem:[#allocation5 + $0xc8] sm:$0xf]
    %v204 = vld [vmem:[#allocation5 + $0xcc] sm:$0xf]
    %v205 = vld [vmem:[#allocation5 + $0xd0] sm:$0xf]
    %v206 = vld [vmem:[#allocation5 + $0xd4] sm:$0xf]
    %v207 = vld [vmem:[#allocation5 + $0xd8] sm:$0xf]
    %v208 = vld [vmem:[#allocation5 + $0xdc] sm:$0xf]
    %v209 = vld [vmem:[#allocation5 + $0xe0] sm:$0xf]
    %v210 = vld [vmem:[#allocation5 + $0xe4] sm:$0xf]
    %v211 = vld [vmem:[#allocation5 + $0xe8] sm:$0xf]
    %v212 = vld [vmem:[#allocation5 + $0xec] sm:$0xf]
    %v213 = vld [vmem:[#allocation5 + $0xf0] sm:$0xf]
    %v214 = vld [vmem:[#allocation5 + $0xf4] sm:$0xf]
    %v215 = vld [vmem:[#allocation5 + $0xf8] sm:$0xf]
    %v216 = vld [vmem:[#allocation5 + $0xfc] sm:$0xf]
    %v217 = vld [vmem:[%s2] sm:$0x1]
    %v219 = vlaneseq
    %v220 = vshrl.u32 %v219, 7
    %v221 = vsub.s32 0, %v220
    %v222 = vrot.slane %v217, %v221
    %v288 = vunpack.c.l.b16 %v153
    %v289 = vunpack.c.l.b16 %v154
    %v290 = vunpack.c.l.b16 %v155
    %v291 = vunpack.c.l.b16 %v156
    %v292 = vunpack.c.l.b16 %v157
    %v293 = vunpack.c.l.b16 %v158
    %v294 = vunpack.c.l.b16 %v159
    %v295 = vunpack.c.l.b16 %v160
    %v296 = vunpack.c.l.b16 %v161
    %v297 = vunpack.c.l.b16 %v162
    %v298 = vunpack.c.l.b16 %v163
    %v299 = vunpack.c.l.b16 %v164
    %v300 = vunpack.c.l.b16 %v165
    %v301 = vunpack.c.l.b16 %v166
    %v302 = vunpack.c.l.b16 %v167
    %v303 = vunpack.c.l.b16 %v168
    %v304 = vunpack.c.l.b16 %v169
    %v305 = vunpack.c.l.b16 %v170
    %v306 = vunpack.c.l.b16 %v171
    %v307 = vunpack.c.l.b16 %v172
    %v308 = vunpack.c.l.b16 %v173
    %v309 = vunpack.c.l.b16 %v174
    %v310 = vunpack.c.l.b16 %v175
    %v311 = vunpack.c.l.b16 %v176
    %v312 = vunpack.c.l.b16 %v177
    %v313 = vunpack.c.l.b16 %v178
    %v314 = vunpack.c.l.b16 %v179
    %v315 = vunpack.c.l.b16 %v180
    %v316 = vunpack.c.l.b16 %v181
    %v317 = vunpack.c.l.b16 %v182
    %v318 = vunpack.c.l.b16 %v183
    %v319 = vunpack.c.l.b16 %v184
    %v320 = vunpack.c.l.b16 %v185
    %v321 = vunpack.c.l.b16 %v186
    %v322 = vunpack.c.l.b16 %v187
    %v323 = vunpack.c.l.b16 %v188
    %v324 = vunpack.c.l.b16 %v189
    %v325 = vunpack.c.l.b16 %v190
    %v326 = vunpack.c.l.b16 %v191
    %v327 = vunpack.c.l.b16 %v192
    %v328 = vunpack.c.l.b16 %v193
    %v329 = vunpack.c.l.b16 %v194
    %v330 = vunpack.c.l.b16 %v195
    %v331 = vunpack.c.l.b16 %v196
    %v332 = vunpack.c.l.b16 %v197
    %v333 = vunpack.c.l.b16 %v198
    %v334 = vunpack.c.l.b16 %v199
    %v335 = vunpack.c.l.b16 %v200
    %v336 = vunpack.c.l.b16 %v201
    %v337 = vunpack.c.l.b16 %v202
    %v338 = vunpack.c.l.b16 %v203
    %v339 = vunpack.c.l.b16 %v204
    %v340 = vunpack.c.l.b16 %v205
    %v341 = vunpack.c.l.b16 %v206
    %v342 = vunpack.c.l.b16 %v207
    %v343 = vunpack.c.l.b16 %v208
    %v344 = vunpack.c.l.b16 %v209
    %v345 = vunpack.c.l.b16 %v210
    %v346 = vunpack.c.l.b16 %v211
    %v347 = vunpack.c.l.b16 %v212
    %v348 = vunpack.c.l.b16 %v213
    %v349 = vunpack.c.l.b16 %v214
    %v350 = vunpack.c.l.b16 %v215
    %v351 = vunpack.c.l.b16 %v216
    %v352 = vpack.c.b16 %v289, %v288
    %v353 = vpack.c.b16 %v291, %v290
    %v354 = vpack.c.b16 %v293, %v292
    %v355 = vpack.c.b16 %v295, %v294
    %v356 = vpack.c.b16 %v297, %v296
    %v357 = vpack.c.b16 %v299, %v298
    %v358 = vpack.c.b16 %v301, %v300
    %v359 = vpack.c.b16 %v303, %v302
    %v360 = vpack.c.b16 %v305, %v304
    %v361 = vpack.c.b16 %v307, %v306
    %v362 = vpack.c.b16 %v309, %v308
    %v363 = vpack.c.b16 %v311, %v310
    %v364 = vpack.c.b16 %v313, %v312
    %v365 = vpack.c.b16 %v315, %v314
    %v366 = vpack.c.b16 %v317, %v316
    %v367 = vpack.c.b16 %v319, %v318
    %v368 = vpack.c.b16 %v321, %v320
    %v369 = vpack.c.b16 %v323, %v322
    %v370 = vpack.c.b16 %v325, %v324
    %v371 = vpack.c.b16 %v327, %v326
    %v372 = vpack.c.b16 %v329, %v328
    %v373 = vpack.c.b16 %v331, %v330
    %v374 = vpack.c.b16 %v333, %v332
    %v375 = vpack.c.b16 %v335, %v334
    %v376 = vpack.c.b16 %v337, %v336
    %v377 = vpack.c.b16 %v339, %v338
    %v378 = vpack.c.b16 %v341, %v340
    %v379 = vpack.c.b16 %v343, %v342
    %v380 = vpack.c.b16 %v345, %v344
    %v381 = vpack.c.b16 %v347, %v346
    %v382 = vpack.c.b16 %v349, %v348
    %v383 = vpack.c.b16 %v351, %v350
    %416 = vmatprep.subr.bf16.mxu0 0
    %417 = vmatpush1.bf16.msra.mxu0 %v352
    %418 = vmatprep.subr.bf16.mxu0 0
    %419 = vmatpush1.bf16.msra.mxu0 %v353
    %420 = vmatprep.subr.bf16.mxu0 0
    %421 = vmatpush1.bf16.msra.mxu0 %v354
    %422 = vmatprep.subr.bf16.mxu0 0
    %423 = vmatpush1.bf16.msra.mxu0 %v355
    %424 = vmatprep.subr.bf16.mxu0 0
    %425 = vmatpush1.bf16.msra.mxu0 %v356
    %426 = vmatprep.subr.bf16.mxu0 0
    %427 = vmatpush1.bf16.msra.mxu0 %v357
    %428 = vmatprep.subr.bf16.mxu0 0
    %429 = vmatpush1.bf16.msra.mxu0 %v358
    %430 = vmatprep.subr.bf16.mxu0 0
    %431 = vmatpush1.bf16.msra.mxu0 %v359
    %432 = vmatprep.subr.bf16.mxu0 0
    %433 = vmatpush1.bf16.msra.mxu0 %v360
    %434 = vmatprep.subr.bf16.mxu0 0
    %435 = vmatpush1.bf16.msra.mxu0 %v361
    %436 = vmatprep.subr.bf16.mxu0 0
    %437 = vmatpush1.bf16.msra.mxu0 %v362
    %438 = vmatprep.subr.bf16.mxu0 0
    %439 = vmatpush1.bf16.msra.mxu0 %v363
    %440 = vmatprep.subr.bf16.mxu0 0
    %441 = vmatpush1.bf16.msra.mxu0 %v364
    %442 = vmatprep.subr.bf16.mxu0 0
    %443 = vmatpush1.bf16.msra.mxu0 %v365
    %444 = vmatprep.subr.bf16.mxu0 0
    %445 = vmatpush1.bf16.msra.mxu0 %v366
    %446 = vmatprep.subr.bf16.mxu0 0
    %447 = vmatpush1.bf16.msra.mxu0 %v367
    %448 = vmatprep.mubr.bf16.mxu0 %v150
    %449 = vmatmul.mubr.bf16.gmra.mrb[0].mxu0 %v149
    %v450 = vpop.f32.mrb[0].mxu0
    %v451 = vadd.f32 %v222, %v450
    %v452 = vpop.f32.mrb[0].mxu0
    %v453 = vpop.f32.mrb[0].mxu0
    %v454 = vadd.f32 %v222, %v453
    %v455 = vpop.f32.mrb[0].mxu0
    %456 = vdwg.mxu0
    %457 = vmatprep.subr.bf16.mxu0 0
    %458 = vmatpush1.bf16.msra.mxu0 %v368
    %459 = vmatprep.subr.bf16.mxu0 0
    %460 = vmatpush1.bf16.msra.mxu0 %v369
    %461 = vmatprep.subr.bf16.mxu0 0
    %462 = vmatpush1.bf16.msra.mxu0 %v370
    %463 = vmatprep.subr.bf16.mxu0 0
    %464 = vmatpush1.bf16.msra.mxu0 %v371
    %465 = vmatprep.subr.bf16.mxu0 0
    %466 = vmatpush1.bf16.msra.mxu0 %v372
    %467 = vmatprep.subr.bf16.mxu0 0
    %468 = vmatpush1.bf16.msra.mxu0 %v373
    %469 = vmatprep.subr.bf16.mxu0 0
    %470 = vmatpush1.bf16.msra.mxu0 %v374
    %471 = vmatprep.subr.bf16.mxu0 0
    %472 = vmatpush1.bf16.msra.mxu0 %v375
    %473 = vmatprep.subr.bf16.mxu0 0
    %474 = vmatpush1.bf16.msra.mxu0 %v376
    %475 = vmatprep.subr.bf16.mxu0 0
    %476 = vmatpush1.bf16.msra.mxu0 %v377
    %477 = vmatprep.subr.bf16.mxu0 0
    %478 = vmatpush1.bf16.msra.mxu0 %v378
    %479 = vmatprep.subr.bf16.mxu0 0
    %480 = vmatpush1.bf16.msra.mxu0 %v379
    %481 = vmatprep.subr.bf16.mxu0 0
    %482 = vmatpush1.bf16.msra.mxu0 %v380
    %483 = vmatprep.subr.bf16.mxu0 0
    %484 = vmatpush1.bf16.msra.mxu0 %v381
    %485 = vmatprep.subr.bf16.mxu0 0
    %486 = vmatpush1.bf16.msra.mxu0 %v382
    %487 = vmatprep.subr.bf16.mxu0 0
    %488 = vmatpush1.bf16.msra.mxu0 %v383
    %489 = vmatprep.mubr.bf16.mxu0 %v152
    %490 = vmatmul.mubr.bf16.gmra.mrb[0].mxu0 %v151
    %v491 = vpop.f32.mrb[0].mxu0
    %v492 = vadd.f32 %v451, %v491
    %v493 = vpop.f32.mrb[0].mxu0
    %v494 = vpop.f32.mrb[0].mxu0
    %v495 = vadd.f32 %v454, %v494
    %v496 = vpop.f32.mrb[0].mxu0
    %497 = vdwg.mxu0
    %v498 = vmax.f32 %v492, 0.0
    %v499 = vmax.f32 %v495, 0.0
    %v500 = vpack.c.bf16 %v499, %v498
    %v501 = vld [vmem:[#allocation7] sm:$0xff]
    %v502 = vld [vmem:[#allocation7 + $0x8] sm:$0xff]
    %v503 = vld [vmem:[#allocation7 + $0x10] sm:$0xff]
    %v504 = vld [vmem:[#allocation7 + $0x18] sm:$0xff]
    %v505 = vld [vmem:[#allocation7 + $0x20] sm:$0xff]
    %v506 = vld [vmem:[#allocation7 + $0x28] sm:$0xff]
    %v507 = vld [vmem:[#allocation7 + $0x30] sm:$0xff]
    %v508 = vld [vmem:[#allocation7 + $0x38] sm:$0xff]
    %v509 = vld [vmem:[#allocation7 + $0x40] sm:$0xff]
    %v510 = vld [vmem:[#allocation7 + $0x48] sm:$0xff]
    %v511 = vld [vmem:[#allocation7 + $0x50] sm:$0xff]
    %v512 = vld [vmem:[#allocation7 + $0x58] sm:$0xff]
    %v513 = vld [vmem:[#allocation7 + $0x60] sm:$0xff]
    %v514 = vld [vmem:[#allocation7 + $0x68] sm:$0xff]
    %v515 = vld [vmem:[#allocation7 + $0x70] sm:$0xff]
    %v516 = vld [vmem:[#allocation7 + $0x78] sm:$0xff]
    %v517 = vld [vmem:[%s4] sm:$0x3]
    %v519 = vlaneseq
    %v520 = vshrl.u32 %v519, 7
    %v521 = vsub.s32 0, %v520
    %v522 = vrot.slane %v517, %v521
    %v523 = vlaneseq
    %v524 = vshrl.u32 %v523, 7
    %v525 = vsub.s32 1, %v524
    %v526 = vrot.slane %v517, %v525
    %v545 = vunpack.c.l.b16 %v501
    %v546 = vunpack.c.h.b16 %v501
    %v547 = vunpack.c.l.b16 %v502
    %v548 = vunpack.c.h.b16 %v502
    %v549 = vunpack.c.l.b16 %v503
    %v550 = vunpack.c.h.b16 %v503
    %v551 = vunpack.c.l.b16 %v504
    %v552 = vunpack.c.h.b16 %v504
    %v553 = vunpack.c.l.b16 %v505
    %v554 = vunpack.c.h.b16 %v505
    %v555 = vunpack.c.l.b16 %v506
    %v556 = vunpack.c.h.b16 %v506
    %v557 = vunpack.c.l.b16 %v507
    %v558 = vunpack.c.h.b16 %v507
    %v559 = vunpack.c.l.b16 %v508
    %v560 = vunpack.c.h.b16 %v508
    %v561 = vunpack.c.l.b16 %v509
    %v562 = vunpack.c.h.b16 %v509
    %v563 = vunpack.c.l.b16 %v510
    %v564 = vunpack.c.h.b16 %v510
    %v565 = vunpack.c.l.b16 %v511
    %v566 = vunpack.c.h.b16 %v511
    %v567 = vunpack.c.l.b16 %v512
    %v568 = vunpack.c.h.b16 %v512
    %v569 = vunpack.c.l.b16 %v513
    %v570 = vunpack.c.h.b16 %v513
    %v571 = vunpack.c.l.b16 %v514
    %v572 = vunpack.c.h.b16 %v514
    %v573 = vunpack.c.l.b16 %v515
    %v574 = vunpack.c.h.b16 %v515
    %v575 = vunpack.c.l.b16 %v516
    %v576 = vunpack.c.h.b16 %v516
    %v577 = vpack.c.b16 %v547, %v545
    %v578 = vpack.c.b16 %v548, %v546
    %v579 = vpack.c.b16 %v551, %v549
    %v580 = vpack.c.b16 %v552, %v550
    %v581 = vpack.c.b16 %v555, %v553
    %v582 = vpack.c.b16 %v556, %v554
    %v583 = vpack.c.b16 %v559, %v557
    %v584 = vpack.c.b16 %v560, %v558
    %v585 = vpack.c.b16 %v563, %v561
    %v586 = vpack.c.b16 %v564, %v562
    %v587 = vpack.c.b16 %v567, %v565
    %v588 = vpack.c.b16 %v568, %v566
    %v589 = vpack.c.b16 %v571, %v569
    %v590 = vpack.c.b16 %v572, %v570
    %v591 = vpack.c.b16 %v575, %v573
    %v592 = vpack.c.b16 %v576, %v574
    %609 = vmatprep.subr.bf16.mxu0 %v578
    %610 = vmatpush1.bf16.msra.mxu0 %v577
    %611 = vmatprep.subr.bf16.mxu0 %v580
    %612 = vmatpush1.bf16.msra.mxu0 %v579
    %613 = vmatprep.subr.bf16.mxu0 %v582
    %614 = vmatpush1.bf16.msra.mxu0 %v581
    %615 = vmatprep.subr.bf16.mxu0 %v584
    %616 = vmatpush1.bf16.msra.mxu0 %v583
    %617 = vmatprep.subr.bf16.mxu0 %v586
    %618 = vmatpush1.bf16.msra.mxu0 %v585
    %619 = vmatprep.subr.bf16.mxu0 %v588
    %620 = vmatpush1.bf16.msra.mxu0 %v587
    %621 = vmatprep.subr.bf16.mxu0 %v590
    %622 = vmatpush1.bf16.msra.mxu0 %v589
    %623 = vmatprep.subr.bf16.mxu0 %v592
    %624 = vmatpush1.bf16.msra.mxu0 %v591
    %625 = vmatprep.subr.bf16.mxu0 0
    %626 = vmatpush1.bf16.msra.mxu0 0
    %627 = vmatprep.subr.bf16.mxu0 0
    %628 = vmatpush1.bf16.msra.mxu0 0
    %629 = vmatprep.subr.bf16.mxu0 0
    %630 = vmatpush1.bf16.msra.mxu0 0
    %631 = vmatprep.subr.bf16.mxu0 0
    %632 = vmatpush1.bf16.msra.mxu0 0
    %633 = vmatprep.subr.bf16.mxu0 0
    %634 = vmatpush1.bf16.msra.mxu0 0
    %635 = vmatprep.subr.bf16.mxu0 0
    %636 = vmatpush1.bf16.msra.mxu0 0
    %637 = vmatprep.subr.bf16.mxu0 0
    %638 = vmatpush1.bf16.msra.mxu0 0
    %639 = vmatprep.subr.bf16.mxu0 0
    %640 = vmatpush1.bf16.msra.mxu0 0
    %641 = vmatprep.mubr.bf16.mxu0 0
    %642 = vmatmul.mubr.bf16.gmra.mrb[0].mxu0 %v500
    %v643 = vpop.f32.mrb[0].mxu0
    %v644 = vadd.f32 %v522, %v643
    %v645 = vpop.f32.mrb[0].mxu0
    %v646 = vadd.f32 %v526, %v645
    %v647 = vpop.f32.mrb[0].mxu0
    %v648 = vadd.f32 %v522, %v647
    %v649 = vpop.f32.mrb[0].mxu0
    %v650 = vadd.f32 %v526, %v649
    %651 = vdwg.mxu0
    %v652 = vmax.f32 %v644, 0.0
    %v653 = vmax.f32 %v646, 0.0
    %v654 = vmax.f32 %v648, 0.0
    %v655 = vmax.f32 %v650, 0.0
    %v656 = vpack.c.bf16 %v654, %v652
    %v657 = vpack.c.bf16 %v655, %v653
    %v658 = vld [vmem:[#allocation8] sm:$0xff]
    %v659 = vld [vmem:[#allocation8 + $0x8] sm:$0xff]
    %v660 = vld [vmem:[#allocation8 + $0x10] sm:$0xff]
    %v661 = vld [vmem:[#allocation8 + $0x18] sm:$0xff]
    %v662 = vld [vmem:[#allocation8 + $0x20] sm:$0xff]
    %v663 = vld [vmem:[#allocation8 + $0x28] sm:$0xff]
    %v664 = vld [vmem:[#allocation8 + $0x30] sm:$0xff]
    %v665 = vld [vmem:[#allocation8 + $0x38] sm:$0xff]
    %v666 = vld [vmem:[#allocation8 + $0x40] sm:$0xff]
    %v667 = vld [vmem:[#allocation8 + $0x48] sm:$0xff]
    %v668 = vld [vmem:[#allocation8 + $0x50] sm:$0xff]
    %v669 = vld [vmem:[#allocation8 + $0x58] sm:$0xff]
    %v670 = vld [vmem:[#allocation8 + $0x60] sm:$0xff]
    %v671 = vld [vmem:[#allocation8 + $0x68] sm:$0xff]
    %v672 = vld [vmem:[#allocation8 + $0x70] sm:$0xff]
    %v673 = vld [vmem:[#allocation8 + $0x78] sm:$0xff]
    %v674 = vld [vmem:[#allocation8 + $0x80] sm:$0xff]
    %v675 = vld [vmem:[#allocation8 + $0x88] sm:$0xff]
    %v676 = vld [vmem:[#allocation8 + $0x90] sm:$0xff]
    %v677 = vld [vmem:[#allocation8 + $0x98] sm:$0xff]
    %v678 = vld [vmem:[#allocation8 + $0xa0] sm:$0xff]
    %v679 = vld [vmem:[#allocation8 + $0xa8] sm:$0xff]
    %v680 = vld [vmem:[#allocation8 + $0xb0] sm:$0xff]
    %v681 = vld [vmem:[#allocation8 + $0xb8] sm:$0xff]
    %v682 = vld [vmem:[#allocation8 + $0xc0] sm:$0xff]
    %v683 = vld [vmem:[#allocation8 + $0xc8] sm:$0xff]
    %v684 = vld [vmem:[#allocation8 + $0xd0] sm:$0xff]
    %v685 = vld [vmem:[#allocation8 + $0xd8] sm:$0xff]
    %v686 = vld [vmem:[#allocation8 + $0xe0] sm:$0xff]
    %v687 = vld [vmem:[#allocation8 + $0xe8] sm:$0xff]
    %v688 = vld [vmem:[#allocation8 + $0xf0] sm:$0xff]
    %v689 = vld [vmem:[#allocation8 + $0xf8] sm:$0xff]
    %v690 = vld [vmem:[#allocation8 + $0x100] sm:$0xff]
    %v691 = vld [vmem:[#allocation8 + $0x108] sm:$0xff]
    %v692 = vld [vmem:[#allocation8 + $0x110] sm:$0xff]
    %v693 = vld [vmem:[#allocation8 + $0x118] sm:$0xff]
    %v694 = vld [vmem:[#allocation8 + $0x120] sm:$0xff]
    %v695 = vld [vmem:[#allocation8 + $0x128] sm:$0xff]
    %v696 = vld [vmem:[#allocation8 + $0x130] sm:$0xff]
    %v697 = vld [vmem:[#allocation8 + $0x138] sm:$0xff]
    %v698 = vld [vmem:[#allocation8 + $0x140] sm:$0xff]
    %v699 = vld [vmem:[#allocation8 + $0x148] sm:$0xff]
    %v700 = vld [vmem:[#allocation8 + $0x150] sm:$0xff]
    %v701 = vld [vmem:[#allocation8 + $0x158] sm:$0xff]
    %v702 = vld [vmem:[#allocation8 + $0x160] sm:$0xff]
    %v703 = vld [vmem:[#allocation8 + $0x168] sm:$0xff]
    %v704 = vld [vmem:[#allocation8 + $0x170] sm:$0xff]
    %v705 = vld [vmem:[#allocation8 + $0x178] sm:$0xff]
    %v706 = vld [vmem:[#allocation8 + $0x180] sm:$0xff]
    %v707 = vld [vmem:[#allocation8 + $0x188] sm:$0xff]
    %v708 = vld [vmem:[#allocation8 + $0x190] sm:$0xff]
    %v709 = vld [vmem:[#allocation8 + $0x198] sm:$0xff]
    %v710 = vld [vmem:[#allocation8 + $0x1a0] sm:$0xff]
    %v711 = vld [vmem:[#allocation8 + $0x1a8] sm:$0xff]
    %v712 = vld [vmem:[#allocation8 + $0x1b0] sm:$0xff]
    %v713 = vld [vmem:[#allocation8 + $0x1b8] sm:$0xff]
    %v714 = vld [vmem:[#allocation8 + $0x1c0] sm:$0xff]
    %v715 = vld [vmem:[#allocation8 + $0x1c8] sm:$0xff]
    %v716 = vld [vmem:[#allocation8 + $0x1d0] sm:$0xff]
    %v717 = vld [vmem:[#allocation8 + $0x1d8] sm:$0xff]
    %v718 = vld [vmem:[#allocation8 + $0x1e0] sm:$0xff]
    %v719 = vld [vmem:[#allocation8 + $0x1e8] sm:$0xff]
    %v720 = vld [vmem:[#allocation8 + $0x1f0] sm:$0xff]
    %v721 = vld [vmem:[#allocation8 + $0x1f8] sm:$0xff]
    %v722 = vld [vmem:[%s6] sm:$0xf]
    %v724 = vlaneseq
    %v725 = vshrl.u32 %v724, 7
    %v726 = vsub.s32 0, %v725
    %v727 = vrot.slane %v722, %v726
    %v728 = vlaneseq
    %v729 = vshrl.u32 %v728, 7
    %v730 = vsub.s32 1, %v729
    %v731 = vrot.slane %v722, %v730
    %v732 = vlaneseq
    %v733 = vshrl.u32 %v732, 7
    %v734 = vsub.s32 2, %v733
    %v735 = vrot.slane %v722, %v734
    %v736 = vlaneseq
    %v737 = vshrl.u32 %v736, 7
    %v738 = vsub.s32 3, %v737
    %v739 = vrot.slane %v722, %v738
    %v808 = vunpack.c.l.b16 %v658
    %v809 = vunpack.c.h.b16 %v658
    %v810 = vunpack.c.l.b16 %v659
    %v811 = vunpack.c.h.b16 %v659
    %v812 = vunpack.c.l.b16 %v660
    %v813 = vunpack.c.h.b16 %v660
    %v814 = vunpack.c.l.b16 %v661
    %v815 = vunpack.c.h.b16 %v661
    %v816 = vunpack.c.l.b16 %v662
    %v817 = vunpack.c.h.b16 %v662
    %v818 = vunpack.c.l.b16 %v663
    %v819 = vunpack.c.h.b16 %v663
    %v820 = vunpack.c.l.b16 %v664
    %v821 = vunpack.c.h.b16 %v664
    %v822 = vunpack.c.l.b16 %v665
    %v823 = vunpack.c.h.b16 %v665
    %v824 = vunpack.c.l.b16 %v666
    %v825 = vunpack.c.h.b16 %v666
    %v826 = vunpack.c.l.b16 %v667
    %v827 = vunpack.c.h.b16 %v667
    %v828 = vunpack.c.l.b16 %v668
    %v829 = vunpack.c.h.b16 %v668
    %v830 = vunpack.c.l.b16 %v669
    %v831 = vunpack.c.h.b16 %v669
    %v832 = vunpack.c.l.b16 %v670
    %v833 = vunpack.c.h.b16 %v670
    %v834 = vunpack.c.l.b16 %v671
    %v835 = vunpack.c.h.b16 %v671
    %v836 = vunpack.c.l.b16 %v672
    %v837 = vunpack.c.h.b16 %v672
    %v838 = vunpack.c.l.b16 %v673
    %v839 = vunpack.c.h.b16 %v673
    %v840 = vunpack.c.l.b16 %v674
    %v841 = vunpack.c.h.b16 %v674
    %v842 = vunpack.c.l.b16 %v675
    %v843 = vunpack.c.h.b16 %v675
    %v844 = vunpack.c.l.b16 %v676
    %v845 = vunpack.c.h.b16 %v676
    %v846 = vunpack.c.l.b16 %v677
    %v847 = vunpack.c.h.b16 %v677
    %v848 = vunpack.c.l.b16 %v678
    %v849 = vunpack.c.h.b16 %v678
    %v850 = vunpack.c.l.b16 %v679
    %v851 = vunpack.c.h.b16 %v679
    %v852 = vunpack.c.l.b16 %v680
    %v853 = vunpack.c.h.b16 %v680
    %v854 = vunpack.c.l.b16 %v681
    %v855 = vunpack.c.h.b16 %v681
    %v856 = vunpack.c.l.b16 %v682
    %v857 = vunpack.c.h.b16 %v682
    %v858 = vunpack.c.l.b16 %v683
    %v859 = vunpack.c.h.b16 %v683
    %v860 = vunpack.c.l.b16 %v684
    %v861 = vunpack.c.h.b16 %v684
    %v862 = vunpack.c.l.b16 %v685
    %v863 = vunpack.c.h.b16 %v685
    %v864 = vunpack.c.l.b16 %v686
    %v865 = vunpack.c.h.b16 %v686
    %v866 = vunpack.c.l.b16 %v687
    %v867 = vunpack.c.h.b16 %v687
    %v868 = vunpack.c.l.b16 %v688
    %v869 = vunpack.c.h.b16 %v688
    %v870 = vunpack.c.l.b16 %v689
    %v871 = vunpack.c.h.b16 %v689
    %v872 = vunpack.c.l.b16 %v690
    %v873 = vunpack.c.h.b16 %v690
    %v874 = vunpack.c.l.b16 %v691
    %v875 = vunpack.c.h.b16 %v691
    %v876 = vunpack.c.l.b16 %v692
    %v877 = vunpack.c.h.b16 %v692
    %v878 = vunpack.c.l.b16 %v693
    %v879 = vunpack.c.h.b16 %v693
    %v880 = vunpack.c.l.b16 %v694
    %v881 = vunpack.c.h.b16 %v694
    %v882 = vunpack.c.l.b16 %v695
    %v883 = vunpack.c.h.b16 %v695
    %v884 = vunpack.c.l.b16 %v696
    %v885 = vunpack.c.h.b16 %v696
    %v886 = vunpack.c.l.b16 %v697
    %v887 = vunpack.c.h.b16 %v697
    %v888 = vunpack.c.l.b16 %v698
    %v889 = vunpack.c.h.b16 %v698
    %v890 = vunpack.c.l.b16 %v699
    %v891 = vunpack.c.h.b16 %v699
    %v892 = vunpack.c.l.b16 %v700
    %v893 = vunpack.c.h.b16 %v700
    %v894 = vunpack.c.l.b16 %v701
    %v895 = vunpack.c.h.b16 %v701
    %v896 = vunpack.c.l.b16 %v702
    %v897 = vunpack.c.h.b16 %v702
    %v898 = vunpack.c.l.b16 %v703
    %v899 = vunpack.c.h.b16 %v703
    %v900 = vunpack.c.l.b16 %v704
    %v901 = vunpack.c.h.b16 %v704
    %v902 = vunpack.c.l.b16 %v705
    %v903 = vunpack.c.h.b16 %v705
    %v904 = vunpack.c.l.b16 %v706
    %v905 = vunpack.c.h.b16 %v706
    %v906 = vunpack.c.l.b16 %v707
    %v907 = vunpack.c.h.b16 %v707
    %v908 = vunpack.c.l.b16 %v708
    %v909 = vunpack.c.h.b16 %v708
    %v910 = vunpack.c.l.b16 %v709
    %v911 = vunpack.c.h.b16 %v709
    %v912 = vunpack.c.l.b16 %v710
    %v913 = vunpack.c.h.b16 %v710
    %v914 = vunpack.c.l.b16 %v711
    %v915 = vunpack.c.h.b16 %v711
    %v916 = vunpack.c.l.b16 %v712
    %v917 = vunpack.c.h.b16 %v712
    %v918 = vunpack.c.l.b16 %v713
    %v919 = vunpack.c.h.b16 %v713
    %v920 = vunpack.c.l.b16 %v714
    %v921 = vunpack.c.h.b16 %v714
    %v922 = vunpack.c.l.b16 %v715
    %v923 = vunpack.c.h.b16 %v715
    %v924 = vunpack.c.l.b16 %v716
    %v925 = vunpack.c.h.b16 %v716
    %v926 = vunpack.c.l.b16 %v717
    %v927 = vunpack.c.h.b16 %v717
    %v928 = vunpack.c.l.b16 %v718
    %v929 = vunpack.c.h.b16 %v718
    %v930 = vunpack.c.l.b16 %v719
    %v931 = vunpack.c.h.b16 %v719
    %v932 = vunpack.c.l.b16 %v720
    %v933 = vunpack.c.h.b16 %v720
    %v934 = vunpack.c.l.b16 %v721
    %v935 = vunpack.c.h.b16 %v721
    %v936 = vpack.c.b16 %v812, %v808
    %v937 = vpack.c.b16 %v813, %v809
    %v938 = vpack.c.b16 %v814, %v810
    %v939 = vpack.c.b16 %v815, %v811
    %v940 = vpack.c.b16 %v820, %v816
    %v941 = vpack.c.b16 %v821, %v817
    %v942 = vpack.c.b16 %v822, %v818
    %v943 = vpack.c.b16 %v823, %v819
    %v944 = vpack.c.b16 %v828, %v824
    %v945 = vpack.c.b16 %v829, %v825
    %v946 = vpack.c.b16 %v830, %v826
    %v947 = vpack.c.b16 %v831, %v827
    %v948 = vpack.c.b16 %v836, %v832
    %v949 = vpack.c.b16 %v837, %v833
    %v950 = vpack.c.b16 %v838, %v834
    %v951 = vpack.c.b16 %v839, %v835
    %v952 = vpack.c.b16 %v844, %v840
    %v953 = vpack.c.b16 %v845, %v841
    %v954 = vpack.c.b16 %v846, %v842
    %v955 = vpack.c.b16 %v847, %v843
    %v956 = vpack.c.b16 %v852, %v848
    %v957 = vpack.c.b16 %v853, %v849
    %v958 = vpack.c.b16 %v854, %v850
    %v959 = vpack.c.b16 %v855, %v851
    %v960 = vpack.c.b16 %v860, %v856
    %v961 = vpack.c.b16 %v861, %v857
    %v962 = vpack.c.b16 %v862, %v858
    %v963 = vpack.c.b16 %v863, %v859
    %v964 = vpack.c.b16 %v868, %v864
    %v965 = vpack.c.b16 %v869, %v865
    %v966 = vpack.c.b16 %v870, %v866
    %v967 = vpack.c.b16 %v871, %v867
    %v968 = vpack.c.b16 %v876, %v872
    %v969 = vpack.c.b16 %v877, %v873
    %v970 = vpack.c.b16 %v878, %v874
    %v971 = vpack.c.b16 %v879, %v875
    %v972 = vpack.c.b16 %v884, %v880
    %v973 = vpack.c.b16 %v885, %v881
    %v974 = vpack.c.b16 %v886, %v882
    %v975 = vpack.c.b16 %v887, %v883
    %v976 = vpack.c.b16 %v892, %v888
    %v977 = vpack.c.b16 %v893, %v889
    %v978 = vpack.c.b16 %v894, %v890
    %v979 = vpack.c.b16 %v895, %v891
    %v980 = vpack.c.b16 %v900, %v896
    %v981 = vpack.c.b16 %v901, %v897
    %v982 = vpack.c.b16 %v902, %v898
    %v983 = vpack.c.b16 %v903, %v899
    %v984 = vpack.c.b16 %v908, %v904
    %v985 = vpack.c.b16 %v909, %v905
    %v986 = vpack.c.b16 %v910, %v906
    %v987 = vpack.c.b16 %v911, %v907
    %v988 = vpack.c.b16 %v916, %v912
    %v989 = vpack.c.b16 %v917, %v913
    %v990 = vpack.c.b16 %v918, %v914
    %v991 = vpack.c.b16 %v919, %v915
    %v992 = vpack.c.b16 %v924, %v920
    %v993 = vpack.c.b16 %v925, %v921
    %v994 = vpack.c.b16 %v926, %v922
    %v995 = vpack.c.b16 %v927, %v923
    %v996 = vpack.c.b16 %v932, %v928
    %v997 = vpack.c.b16 %v933, %v929
    %v998 = vpack.c.b16 %v934, %v930
    %v999 = vpack.c.b16 %v935, %v931
    %1064 = vmatprep.subr.bf16.mxu0 %v937
    %1065 = vmatpush1.bf16.msra.mxu0 %v936
    %1066 = vmatprep.subr.bf16.mxu0 %v941
    %1067 = vmatpush1.bf16.msra.mxu0 %v940
    %1068 = vmatprep.subr.bf16.mxu0 %v945
    %1069 = vmatpush1.bf16.msra.mxu0 %v944
    %1070 = vmatprep.subr.bf16.mxu0 %v949
    %1071 = vmatpush1.bf16.msra.mxu0 %v948
    %1072 = vmatprep.subr.bf16.mxu0 %v953
    %1073 = vmatpush1.bf16.msra.mxu0 %v952
    %1074 = vmatprep.subr.bf16.mxu0 %v957
    %1075 = vmatpush1.bf16.msra.mxu0 %v956
    %1076 = vmatprep.subr.bf16.mxu0 %v961
    %1077 = vmatpush1.bf16.msra.mxu0 %v960
    %1078 = vmatprep.subr.bf16.mxu0 %v965
    %1079 = vmatpush1.bf16.msra.mxu0 %v964
    %1080 = vmatprep.subr.bf16.mxu0 %v969
    %1081 = vmatpush1.bf16.msra.mxu0 %v968
    %1082 = vmatprep.subr.bf16.mxu0 %v973
    %1083 = vmatpush1.bf16.msra.mxu0 %v972
    %1084 = vmatprep.subr.bf16.mxu0 %v977
    %1085 = vmatpush1.bf16.msra.mxu0 %v976
    %1086 = vmatprep.subr.bf16.mxu0 %v981
    %1087 = vmatpush1.bf16.msra.mxu0 %v980
    %1088 = vmatprep.subr.bf16.mxu0 %v985
    %1089 = vmatpush1.bf16.msra.mxu0 %v984
    %1090 = vmatprep.subr.bf16.mxu0 %v989
    %1091 = vmatpush1.bf16.msra.mxu0 %v988
    %1092 = vmatprep.subr.bf16.mxu0 %v993
    %1093 = vmatpush1.bf16.msra.mxu0 %v992
    %1094 = vmatprep.subr.bf16.mxu0 %v997
    %1095 = vmatpush1.bf16.msra.mxu0 %v996
    %1096 = vmatprep.mubr.bf16.mxu0 %v657
    %1097 = vmatmul.mubr.bf16.gmra.mrb[0].mxu0 %v656
    %v1098 = vpop.f32.mrb[0].mxu0
    %v1099 = vadd.f32 %v727, %v1098
    %v1100 = vpop.f32.mrb[0].mxu0
    %v1101 = vadd.f32 %v731, %v1100
    %v1102 = vpop.f32.mrb[0].mxu0
    %v1103 = vadd.f32 %v727, %v1102
    %v1104 = vpop.f32.mrb[0].mxu0
    %v1105 = vadd.f32 %v731, %v1104
    %1106 = vdwg.mxu0
    %1107 = vmatprep.subr.bf16.mxu0 %v939
    %1108 = vmatpush1.bf16.msra.mxu0 %v938
    %1109 = vmatprep.subr.bf16.mxu0 %v943
    %1110 = vmatpush1.bf16.msra.mxu0 %v942
    %1111 = vmatprep.subr.bf16.mxu0 %v947
    %1112 = vmatpush1.bf16.msra.mxu0 %v946
    %1113 = vmatprep.subr.bf16.mxu0 %v951
    %1114 = vmatpush1.bf16.msra.mxu0 %v950
    %1115 = vmatprep.subr.bf16.mxu0 %v955
    %1116 = vmatpush1.bf16.msra.mxu0 %v954
    %1117 = vmatprep.subr.bf16.mxu0 %v959
    %1118 = vmatpush1.bf16.msra.mxu0 %v958
    %1119 = vmatprep.subr.bf16.mxu0 %v963
    %1120 = vmatpush1.bf16.msra.mxu0 %v962
    %1121 = vmatprep.subr.bf16.mxu0 %v967
    %1122 = vmatpush1.bf16.msra.mxu0 %v966
    %1123 = vmatprep.subr.bf16.mxu0 %v971
    %1124 = vmatpush1.bf16.msra.mxu0 %v970
    %1125 = vmatprep.subr.bf16.mxu0 %v975
    %1126 = vmatpush1.bf16.msra.mxu0 %v974
    %1127 = vmatprep.subr.bf16.mxu0 %v979
    %1128 = vmatpush1.bf16.msra.mxu0 %v978
    %1129 = vmatprep.subr.bf16.mxu0 %v983
    %1130 = vmatpush1.bf16.msra.mxu0 %v982
    %1131 = vmatprep.subr.bf16.mxu0 %v987
    %1132 = vmatpush1.bf16.msra.mxu0 %v986
    %1133 = vmatprep.subr.bf16.mxu0 %v991
    %1134 = vmatpush1.bf16.msra.mxu0 %v990
    %1135 = vmatprep.subr.bf16.mxu0 %v995
    %1136 = vmatpush1.bf16.msra.mxu0 %v994
    %1137 = vmatprep.subr.bf16.mxu0 %v999
    %1138 = vmatpush1.bf16.msra.mxu0 %v998
    %1139 = vmatprep.mubr.bf16.mxu0 %v657
    %1140 = vmatmul.mubr.bf16.gmra.mrb[0].mxu0 %v656
    %v1141 = vpop.f32.mrb[0].mxu0
    %v1142 = vadd.f32 %v735, %v1141
    %v1143 = vpop.f32.mrb[0].mxu0
    %v1144 = vadd.f32 %v739, %v1143
    %v1145 = vpop.f32.mrb[0].mxu0
    %v1146 = vadd.f32 %v735, %v1145
    %v1147 = vpop.f32.mrb[0].mxu0
    %v1148 = vadd.f32 %v739, %v1147
    %1149 = vdwg.mxu0
    %v1150 = vmax.f32 %v1099, 0.0
    %v1151 = vmax.f32 %v1101, 0.0
    %v1152 = vmax.f32 %v1142, 0.0
    %v1153 = vmax.f32 %v1144, 0.0
    %v1154 = vmax.f32 %v1103, 0.0
    %v1155 = vmax.f32 %v1105, 0.0
    %v1156 = vmax.f32 %v1146, 0.0
    %v1157 = vmax.f32 %v1148, 0.0
    %v1158 = vpack.c.bf16 %v1154, %v1150
    %v1159 = vpack.c.bf16 %v1155, %v1151
    %v1160 = vpack.c.bf16 %v1156, %v1152
    %v1161 = vpack.c.bf16 %v1157, %v1153
    %v1162 = vld [vmem:[#allocation10] sm:$0xff]
    %v1163 = vld [vmem:[#allocation10 + $0x8] sm:$0xff]
    %v1164 = vld [vmem:[#allocation10 + $0x10] sm:$0xff]
    %v1165 = vld [vmem:[#allocation10 + $0x18] sm:$0xff]
    %v1166 = vld [vmem:[#allocation10 + $0x20] sm:$0xff]
    %v1167 = vld [vmem:[#allocation10 + $0x28] sm:$0xff]
    %v1168 = vld [vmem:[#allocation10 + $0x30] sm:$0xff]
    %v1169 = vld [vmem:[#allocation10 + $0x38] sm:$0xff]
    %v1170 = vld [vmem:[#allocation10 + $0x40] sm:$0xff]
    %v1171 = vld [vmem:[#allocation10 + $0x48] sm:$0xff]
    %v1172 = vld [vmem:[#allocation10 + $0x50] sm:$0xff]
    %v1173 = vld [vmem:[#allocation10 + $0x58] sm:$0xff]
    %v1174 = vld [vmem:[#allocation10 + $0x60] sm:$0xff]
    %v1175 = vld [vmem:[#allocation10 + $0x68] sm:$0xff]
    %v1176 = vld [vmem:[#allocation10 + $0x70] sm:$0xff]
    %v1177 = vld [vmem:[#allocation10 + $0x78] sm:$0xff]
    %v1178 = vld [vmem:[#allocation10 + $0x80] sm:$0xff]
    %v1179 = vld [vmem:[#allocation10 + $0x88] sm:$0xff]
    %v1180 = vld [vmem:[#allocation10 + $0x90] sm:$0xff]
    %v1181 = vld [vmem:[#allocation10 + $0x98] sm:$0xff]
    %v1182 = vld [vmem:[#allocation10 + $0xa0] sm:$0xff]
    %v1183 = vld [vmem:[#allocation10 + $0xa8] sm:$0xff]
    %v1184 = vld [vmem:[#allocation10 + $0xb0] sm:$0xff]
    %v1185 = vld [vmem:[#allocation10 + $0xb8] sm:$0xff]
    %v1186 = vld [vmem:[#allocation10 + $0xc0] sm:$0xff]
    %v1187 = vld [vmem:[#allocation10 + $0xc8] sm:$0xff]
    %v1188 = vld [vmem:[#allocation10 + $0xd0] sm:$0xff]
    %v1189 = vld [vmem:[#allocation10 + $0xd8] sm:$0xff]
    %v1190 = vld [vmem:[#allocation10 + $0xe0] sm:$0xff]
    %v1191 = vld [vmem:[#allocation10 + $0xe8] sm:$0xff]
    %v1192 = vld [vmem:[#allocation10 + $0xf0] sm:$0xff]
    %v1193 = vld [vmem:[#allocation10 + $0xf8] sm:$0xff]
    %v1194 = vld [vmem:[#allocation10 + $0x100] sm:$0xff]
    %v1195 = vld [vmem:[#allocation10 + $0x108] sm:$0xff]
    %v1196 = vld [vmem:[#allocation10 + $0x110] sm:$0xff]
    %v1197 = vld [vmem:[#allocation10 + $0x118] sm:$0xff]
    %v1198 = vld [vmem:[#allocation10 + $0x120] sm:$0xff]
    %v1199 = vld [vmem:[#allocation10 + $0x128] sm:$0xff]
    %v1200 = vld [vmem:[#allocation10 + $0x130] sm:$0xff]
    %v1201 = vld [vmem:[#allocation10 + $0x138] sm:$0xff]
    %v1202 = vld [vmem:[#allocation10 + $0x140] sm:$0xff]
    %v1203 = vld [vmem:[#allocation10 + $0x148] sm:$0xff]
    %v1204 = vld [vmem:[#allocation10 + $0x150] sm:$0xff]
    %v1205 = vld [vmem:[#allocation10 + $0x158] sm:$0xff]
    %v1206 = vld [vmem:[#allocation10 + $0x160] sm:$0xff]
    %v1207 = vld [vmem:[#allocation10 + $0x168] sm:$0xff]
    %v1208 = vld [vmem:[#allocation10 + $0x170] sm:$0xff]
    %v1209 = vld [vmem:[#allocation10 + $0x178] sm:$0xff]
    %v1210 = vld [vmem:[#allocation10 + $0x180] sm:$0xff]
    %v1211 = vld [vmem:[#allocation10 + $0x188] sm:$0xff]
    %v1212 = vld [vmem:[#allocation10 + $0x190] sm:$0xff]
    %v1213 = vld [vmem:[#allocation10 + $0x198] sm:$0xff]
    %v1214 = vld [vmem:[#allocation10 + $0x1a0] sm:$0xff]
    %v1215 = vld [vmem:[#allocation10 + $0x1a8] sm:$0xff]
    %v1216 = vld [vmem:[#allocation10 + $0x1b0] sm:$0xff]
    %v1217 = vld [vmem:[#allocation10 + $0x1b8] sm:$0xff]
    %v1218 = vld [vmem:[#allocation10 + $0x1c0] sm:$0xff]
    %v1219 = vld [vmem:[#allocation10 + $0x1c8] sm:$0xff]
    %v1220 = vld [vmem:[#allocation10 + $0x1d0] sm:$0xff]
    %v1221 = vld [vmem:[#allocation10 + $0x1d8] sm:$0xff]
    %v1222 = vld [vmem:[#allocation10 + $0x1e0] sm:$0xff]
    %v1223 = vld [vmem:[#allocation10 + $0x1e8] sm:$0xff]
    %v1224 = vld [vmem:[#allocation10 + $0x1f0] sm:$0xff]
    %v1225 = vld [vmem:[#allocation10 + $0x1f8] sm:$0xff]
    %v1226 = vld [vmem:[%s8] sm:$0x3]
    %v1228 = vlaneseq
    %v1229 = vshrl.u32 %v1228, 7
    %v1230 = vsub.s32 0, %v1229
    %v1231 = vrot.slane %v1226, %v1230
    %v1232 = vlaneseq
    %v1233 = vshrl.u32 %v1232, 7
    %v1234 = vsub.s32 1, %v1233
    %v1235 = vrot.slane %v1226, %v1234
    %v1302 = vunpack.c.l.b16 %v1162
    %v1303 = vunpack.c.h.b16 %v1162
    %v1304 = vunpack.c.l.b16 %v1163
    %v1305 = vunpack.c.h.b16 %v1163
    %v1306 = vunpack.c.l.b16 %v1164
    %v1307 = vunpack.c.h.b16 %v1164
    %v1308 = vunpack.c.l.b16 %v1165
    %v1309 = vunpack.c.h.b16 %v1165
    %v1310 = vunpack.c.l.b16 %v1166
    %v1311 = vunpack.c.h.b16 %v1166
    %v1312 = vunpack.c.l.b16 %v1167
    %v1313 = vunpack.c.h.b16 %v1167
    %v1314 = vunpack.c.l.b16 %v1168
    %v1315 = vunpack.c.h.b16 %v1168
    %v1316 = vunpack.c.l.b16 %v1169
    %v1317 = vunpack.c.h.b16 %v1169
    %v1318 = vunpack.c.l.b16 %v1170
    %v1319 = vunpack.c.h.b16 %v1170
    %v1320 = vunpack.c.l.b16 %v1171
    %v1321 = vunpack.c.h.b16 %v1171
    %v1322 = vunpack.c.l.b16 %v1172
    %v1323 = vunpack.c.h.b16 %v1172
    %v1324 = vunpack.c.l.b16 %v1173
    %v1325 = vunpack.c.h.b16 %v1173
    %v1326 = vunpack.c.l.b16 %v1174
    %v1327 = vunpack.c.h.b16 %v1174
    %v1328 = vunpack.c.l.b16 %v1175
    %v1329 = vunpack.c.h.b16 %v1175
    %v1330 = vunpack.c.l.b16 %v1176
    %v1331 = vunpack.c.h.b16 %v1176
    %v1332 = vunpack.c.l.b16 %v1177
    %v1333 = vunpack.c.h.b16 %v1177
    %v1334 = vunpack.c.l.b16 %v1178
    %v1335 = vunpack.c.h.b16 %v1178
    %v1336 = vunpack.c.l.b16 %v1179
    %v1337 = vunpack.c.h.b16 %v1179
    %v1338 = vunpack.c.l.b16 %v1180
    %v1339 = vunpack.c.h.b16 %v1180
    %v1340 = vunpack.c.l.b16 %v1181
    %v1341 = vunpack.c.h.b16 %v1181
    %v1342 = vunpack.c.l.b16 %v1182
    %v1343 = vunpack.c.h.b16 %v1182
    %v1344 = vunpack.c.l.b16 %v1183
    %v1345 = vunpack.c.h.b16 %v1183
    %v1346 = vunpack.c.l.b16 %v1184
    %v1347 = vunpack.c.h.b16 %v1184
    %v1348 = vunpack.c.l.b16 %v1185
    %v1349 = vunpack.c.h.b16 %v1185
    %v1350 = vunpack.c.l.b16 %v1186
    %v1351 = vunpack.c.h.b16 %v1186
    %v1352 = vunpack.c.l.b16 %v1187
    %v1353 = vunpack.c.h.b16 %v1187
    %v1354 = vunpack.c.l.b16 %v1188
    %v1355 = vunpack.c.h.b16 %v1188
    %v1356 = vunpack.c.l.b16 %v1189
    %v1357 = vunpack.c.h.b16 %v1189
    %v1358 = vunpack.c.l.b16 %v1190
    %v1359 = vunpack.c.h.b16 %v1190
    %v1360 = vunpack.c.l.b16 %v1191
    %v1361 = vunpack.c.h.b16 %v1191
    %v1362 = vunpack.c.l.b16 %v1192
    %v1363 = vunpack.c.h.b16 %v1192
    %v1364 = vunpack.c.l.b16 %v1193
    %v1365 = vunpack.c.h.b16 %v1193
    %v1366 = vunpack.c.l.b16 %v1194
    %v1367 = vunpack.c.h.b16 %v1194
    %v1368 = vunpack.c.l.b16 %v1195
    %v1369 = vunpack.c.h.b16 %v1195
    %v1370 = vunpack.c.l.b16 %v1196
    %v1371 = vunpack.c.h.b16 %v1196
    %v1372 = vunpack.c.l.b16 %v1197
    %v1373 = vunpack.c.h.b16 %v1197
    %v1374 = vunpack.c.l.b16 %v1198
    %v1375 = vunpack.c.h.b16 %v1198
    %v1376 = vunpack.c.l.b16 %v1199
    %v1377 = vunpack.c.h.b16 %v1199
    %v1378 = vunpack.c.l.b16 %v1200
    %v1379 = vunpack.c.h.b16 %v1200
    %v1380 = vunpack.c.l.b16 %v1201
    %v1381 = vunpack.c.h.b16 %v1201
    %v1382 = vunpack.c.l.b16 %v1202
    %v1383 = vunpack.c.h.b16 %v1202
    %v1384 = vunpack.c.l.b16 %v1203
    %v1385 = vunpack.c.h.b16 %v1203
    %v1386 = vunpack.c.l.b16 %v1204
    %v1387 = vunpack.c.h.b16 %v1204
    %v1388 = vunpack.c.l.b16 %v1205
    %v1389 = vunpack.c.h.b16 %v1205
    %v1390 = vunpack.c.l.b16 %v1206
    %v1391 = vunpack.c.h.b16 %v1206
    %v1392 = vunpack.c.l.b16 %v1207
    %v1393 = vunpack.c.h.b16 %v1207
    %v1394 = vunpack.c.l.b16 %v1208
    %v1395 = vunpack.c.h.b16 %v1208
    %v1396 = vunpack.c.l.b16 %v1209
    %v1397 = vunpack.c.h.b16 %v1209
    %v1398 = vunpack.c.l.b16 %v1210
    %v1399 = vunpack.c.h.b16 %v1210
    %v1400 = vunpack.c.l.b16 %v1211
    %v1401 = vunpack.c.h.b16 %v1211
    %v1402 = vunpack.c.l.b16 %v1212
    %v1403 = vunpack.c.h.b16 %v1212
    %v1404 = vunpack.c.l.b16 %v1213
    %v1405 = vunpack.c.h.b16 %v1213
    %v1406 = vunpack.c.l.b16 %v1214
    %v1407 = vunpack.c.h.b16 %v1214
    %v1408 = vunpack.c.l.b16 %v1215
    %v1409 = vunpack.c.h.b16 %v1215
    %v1410 = vunpack.c.l.b16 %v1216
    %v1411 = vunpack.c.h.b16 %v1216
    %v1412 = vunpack.c.l.b16 %v1217
    %v1413 = vunpack.c.h.b16 %v1217
    %v1414 = vunpack.c.l.b16 %v1218
    %v1415 = vunpack.c.h.b16 %v1218
    %v1416 = vunpack.c.l.b16 %v1219
    %v1417 = vunpack.c.h.b16 %v1219
    %v1418 = vunpack.c.l.b16 %v1220
    %v1419 = vunpack.c.h.b16 %v1220
    %v1420 = vunpack.c.l.b16 %v1221
    %v1421 = vunpack.c.h.b16 %v1221
    %v1422 = vunpack.c.l.b16 %v1222
    %v1423 = vunpack.c.h.b16 %v1222
    %v1424 = vunpack.c.l.b16 %v1223
    %v1425 = vunpack.c.h.b16 %v1223
    %v1426 = vunpack.c.l.b16 %v1224
    %v1427 = vunpack.c.h.b16 %v1224
    %v1428 = vunpack.c.l.b16 %v1225
    %v1429 = vunpack.c.h.b16 %v1225
    %v1430 = vpack.c.b16 %v1304, %v1302
    %v1431 = vpack.c.b16 %v1305, %v1303
    %v1432 = vpack.c.b16 %v1308, %v1306
    %v1433 = vpack.c.b16 %v1309, %v1307
    %v1434 = vpack.c.b16 %v1312, %v1310
    %v1435 = vpack.c.b16 %v1313, %v1311
    %v1436 = vpack.c.b16 %v1316, %v1314
    %v1437 = vpack.c.b16 %v1317, %v1315
    %v1438 = vpack.c.b16 %v1320, %v1318
    %v1439 = vpack.c.b16 %v1321, %v1319
    %v1440 = vpack.c.b16 %v1324, %v1322
    %v1441 = vpack.c.b16 %v1325, %v1323
    %v1442 = vpack.c.b16 %v1328, %v1326
    %v1443 = vpack.c.b16 %v1329, %v1327
    %v1444 = vpack.c.b16 %v1332, %v1330
    %v1445 = vpack.c.b16 %v1333, %v1331
    %v1446 = vpack.c.b16 %v1336, %v1334
    %v1447 = vpack.c.b16 %v1337, %v1335
    %v1448 = vpack.c.b16 %v1340, %v1338
    %v1449 = vpack.c.b16 %v1341, %v1339
    %v1450 = vpack.c.b16 %v1344, %v1342
    %v1451 = vpack.c.b16 %v1345, %v1343
    %v1452 = vpack.c.b16 %v1348, %v1346
    %v1453 = vpack.c.b16 %v1349, %v1347
    %v1454 = vpack.c.b16 %v1352, %v1350
    %v1455 = vpack.c.b16 %v1353, %v1351
    %v1456 = vpack.c.b16 %v1356, %v1354
    %v1457 = vpack.c.b16 %v1357, %v1355
    %v1458 = vpack.c.b16 %v1360, %v1358
    %v1459 = vpack.c.b16 %v1361, %v1359
    %v1460 = vpack.c.b16 %v1364, %v1362
    %v1461 = vpack.c.b16 %v1365, %v1363
    %v1462 = vpack.c.b16 %v1368, %v1366
    %v1463 = vpack.c.b16 %v1369, %v1367
    %v1464 = vpack.c.b16 %v1372, %v1370
    %v1465 = vpack.c.b16 %v1373, %v1371
    %v1466 = vpack.c.b16 %v1376, %v1374
    %v1467 = vpack.c.b16 %v1377, %v1375
    %v1468 = vpack.c.b16 %v1380, %v1378
    %v1469 = vpack.c.b16 %v1381, %v1379
    %v1470 = vpack.c.b16 %v1384, %v1382
    %v1471 = vpack.c.b16 %v1385, %v1383
    %v1472 = vpack.c.b16 %v1388, %v1386
    %v1473 = vpack.c.b16 %v1389, %v1387
    %v1474 = vpack.c.b16 %v1392, %v1390
    %v1475 = vpack.c.b16 %v1393, %v1391
    %v1476 = vpack.c.b16 %v1396, %v1394
    %v1477 = vpack.c.b16 %v1397, %v1395
    %v1478 = vpack.c.b16 %v1400, %v1398
    %v1479 = vpack.c.b16 %v1401, %v1399
    %v1480 = vpack.c.b16 %v1404, %v1402
    %v1481 = vpack.c.b16 %v1405, %v1403
    %v1482 = vpack.c.b16 %v1408, %v1406
    %v1483 = vpack.c.b16 %v1409, %v1407
    %v1484 = vpack.c.b16 %v1412, %v1410
    %v1485 = vpack.c.b16 %v1413, %v1411
    %v1486 = vpack.c.b16 %v1416, %v1414
    %v1487 = vpack.c.b16 %v1417, %v1415
    %v1488 = vpack.c.b16 %v1420, %v1418
    %v1489 = vpack.c.b16 %v1421, %v1419
    %v1490 = vpack.c.b16 %v1424, %v1422
    %v1491 = vpack.c.b16 %v1425, %v1423
    %v1492 = vpack.c.b16 %v1428, %v1426
    %v1493 = vpack.c.b16 %v1429, %v1427
    %1558 = vmatprep.subr.bf16.mxu0 %v1431
    %1559 = vmatpush1.bf16.msra.mxu0 %v1430
    %1560 = vmatprep.subr.bf16.mxu0 %v1433
    %1561 = vmatpush1.bf16.msra.mxu0 %v1432
    %1562 = vmatprep.subr.bf16.mxu0 %v1435
    %1563 = vmatpush1.bf16.msra.mxu0 %v1434
    %1564 = vmatprep.subr.bf16.mxu0 %v1437
    %1565 = vmatpush1.bf16.msra.mxu0 %v1436
    %1566 = vmatprep.subr.bf16.mxu0 %v1439
    %1567 = vmatpush1.bf16.msra.mxu0 %v1438
    %1568 = vmatprep.subr.bf16.mxu0 %v1441
    %1569 = vmatpush1.bf16.msra.mxu0 %v1440
    %1570 = vmatprep.subr.bf16.mxu0 %v1443
    %1571 = vmatpush1.bf16.msra.mxu0 %v1442
    %1572 = vmatprep.subr.bf16.mxu0 %v1445
    %1573 = vmatpush1.bf16.msra.mxu0 %v1444
    %1574 = vmatprep.subr.bf16.mxu0 %v1447
    %1575 = vmatpush1.bf16.msra.mxu0 %v1446
    %1576 = vmatprep.subr.bf16.mxu0 %v1449
    %1577 = vmatpush1.bf16.msra.mxu0 %v1448
    %1578 = vmatprep.subr.bf16.mxu0 %v1451
    %1579 = vmatpush1.bf16.msra.mxu0 %v1450
    %1580 = vmatprep.subr.bf16.mxu0 %v1453
    %1581 = vmatpush1.bf16.msra.mxu0 %v1452
    %1582 = vmatprep.subr.bf16.mxu0 %v1455
    %1583 = vmatpush1.bf16.msra.mxu0 %v1454
    %1584 = vmatprep.subr.bf16.mxu0 %v1457
    %1585 = vmatpush1.bf16.msra.mxu0 %v1456
    %1586 = vmatprep.subr.bf16.mxu0 %v1459
    %1587 = vmatpush1.bf16.msra.mxu0 %v1458
    %1588 = vmatprep.subr.bf16.mxu0 %v1461
    %1589 = vmatpush1.bf16.msra.mxu0 %v1460
    %1590 = vmatprep.mubr.bf16.mxu0 %v1159
    %1591 = vmatmul.mubr.bf16.gmra.mrb[0].mxu0 %v1158
    %v1592 = vpop.f32.mrb[0].mxu0
    %v1593 = vadd.f32 %v1231, %v1592
    %v1594 = vpop.f32.mrb[0].mxu0
    %v1595 = vadd.f32 %v1235, %v1594
    %v1596 = vpop.f32.mrb[0].mxu0
    %v1597 = vadd.f32 %v1231, %v1596
    %v1598 = vpop.f32.mrb[0].mxu0
    %v1599 = vadd.f32 %v1235, %v1598
    %1600 = vdwg.mxu0
    %1601 = vmatprep.subr.bf16.mxu0 %v1463
    %1602 = vmatpush1.bf16.msra.mxu0 %v1462
    %1603 = vmatprep.subr.bf16.mxu0 %v1465
    %1604 = vmatpush1.bf16.msra.mxu0 %v1464
    %1605 = vmatprep.subr.bf16.mxu0 %v1467
    %1606 = vmatpush1.bf16.msra.mxu0 %v1466
    %1607 = vmatprep.subr.bf16.mxu0 %v1469
    %1608 = vmatpush1.bf16.msra.mxu0 %v1468
    %1609 = vmatprep.subr.bf16.mxu0 %v1471
    %1610 = vmatpush1.bf16.msra.mxu0 %v1470
    %1611 = vmatprep.subr.bf16.mxu0 %v1473
    %1612 = vmatpush1.bf16.msra.mxu0 %v1472
    %1613 = vmatprep.subr.bf16.mxu0 %v1475
    %1614 = vmatpush1.bf16.msra.mxu0 %v1474
    %1615 = vmatprep.subr.bf16.mxu0 %v1477
    %1616 = vmatpush1.bf16.msra.mxu0 %v1476
    %1617 = vmatprep.subr.bf16.mxu0 %v1479
    %1618 = vmatpush1.bf16.msra.mxu0 %v1478
    %1619 = vmatprep.subr.bf16.mxu0 %v1481
    %1620 = vmatpush1.bf16.msra.mxu0 %v1480
    %1621 = vmatprep.subr.bf16.mxu0 %v1483
    %1622 = vmatpush1.bf16.msra.mxu0 %v1482
    %1623 = vmatprep.subr.bf16.mxu0 %v1485
    %1624 = vmatpush1.bf16.msra.mxu0 %v1484
    %1625 = vmatprep.subr.bf16.mxu0 %v1487
    %1626 = vmatpush1.bf16.msra.mxu0 %v1486
    %1627 = vmatprep.subr.bf16.mxu0 %v1489
    %1628 = vmatpush1.bf16.msra.mxu0 %v1488
    %1629 = vmatprep.subr.bf16.mxu0 %v1491
    %1630 = vmatpush1.bf16.msra.mxu0 %v1490
    %1631 = vmatprep.subr.bf16.mxu0 %v1493
    %1632 = vmatpush1.bf16.msra.mxu0 %v1492
    %1633 = vmatprep.mubr.bf16.mxu0 %v1161
    %1634 = vmatmul.mubr.bf16.gmra.mrb[0].mxu0 %v1160
    %v1635 = vpop.f32.mrb[0].mxu0
    %v1636 = vadd.f32 %v1593, %v1635
    %v1637 = vpop.f32.mrb[0].mxu0
    %v1638 = vadd.f32 %v1595, %v1637
    %v1639 = vpop.f32.mrb[0].mxu0
    %v1640 = vadd.f32 %v1597, %v1639
    %v1641 = vpop.f32.mrb[0].mxu0
    %v1642 = vadd.f32 %v1599, %v1641
    %1643 = vdwg.mxu0
    %v1644 = vmax.f32 %v1636, 0.0
    %v1645 = vmax.f32 %v1638, 0.0
    %v1646 = vmax.f32 %v1640, 0.0
    %v1647 = vmax.f32 %v1642, 0.0
    %v1648 = vpack.c.bf16 %v1646, %v1644
    %v1649 = vpack.c.bf16 %v1647, %v1645
    %v1650 = vld [vmem:[#allocation11] sm:$0xf]
    %v1651 = vld [vmem:[#allocation11 + $0x4] sm:$0xf]
    %v1652 = vld [vmem:[#allocation11 + $0x8] sm:$0xf]
    %v1653 = vld [vmem:[#allocation11 + $0xc] sm:$0xf]
    %v1654 = vld [vmem:[#allocation11 + $0x10] sm:$0xf]
    %v1655 = vld [vmem:[#allocation11 + $0x14] sm:$0xf]
    %v1656 = vld [vmem:[#allocation11 + $0x18] sm:$0xf]
    %v1657 = vld [vmem:[#allocation11 + $0x1c] sm:$0xf]
    %v1658 = vld [vmem:[#allocation11 + $0x20] sm:$0xf]
    %v1659 = vld [vmem:[#allocation11 + $0x24] sm:$0xf]
    %v1660 = vld [vmem:[#allocation11 + $0x28] sm:$0xf]
    %v1661 = vld [vmem:[#allocation11 + $0x2c] sm:$0xf]
    %v1662 = vld [vmem:[#allocation11 + $0x30] sm:$0xf]
    %v1663 = vld [vmem:[#allocation11 + $0x34] sm:$0xf]
    %v1664 = vld [vmem:[#allocation11 + $0x38] sm:$0xf]
    %v1665 = vld [vmem:[#allocation11 + $0x3c] sm:$0xf]
    %v1666 = vld [vmem:[#allocation11 + $0x40] sm:$0xf]
    %v1667 = vld [vmem:[#allocation11 + $0x44] sm:$0xf]
    %v1668 = vld [vmem:[#allocation11 + $0x48] sm:$0xf]
    %v1669 = vld [vmem:[#allocation11 + $0x4c] sm:$0xf]
    %v1670 = vld [vmem:[#allocation11 + $0x50] sm:$0xf]
    %v1671 = vld [vmem:[#allocation11 + $0x54] sm:$0xf]
    %v1672 = vld [vmem:[#allocation11 + $0x58] sm:$0xf]
    %v1673 = vld [vmem:[#allocation11 + $0x5c] sm:$0xf]
    %v1674 = vld [vmem:[#allocation11 + $0x60] sm:$0xf]
    %v1675 = vld [vmem:[#allocation11 + $0x64] sm:$0xf]
    %v1676 = vld [vmem:[#allocation11 + $0x68] sm:$0xf]
    %v1677 = vld [vmem:[#allocation11 + $0x6c] sm:$0xf]
    %v1678 = vld [vmem:[#allocation11 + $0x70] sm:$0xf]
    %v1679 = vld [vmem:[#allocation11 + $0x74] sm:$0xf]
    %v1680 = vld [vmem:[#allocation11 + $0x78] sm:$0xf]
    %v1681 = vld [vmem:[#allocation11 + $0x7c] sm:$0xf]
    %v1682 = vld [vmem:[%s10] sm:$0x1]
    %v1684 = vlaneseq
    %v1685 = vshrl.u32 %v1684, 7
    %v1686 = vsub.s32 0, %v1685
    %v1687 = vrot.slane %v1682, %v1686
    %v1721 = vunpack.c.l.b16 %v1650
    %v1722 = vunpack.c.l.b16 %v1651
    %v1723 = vunpack.c.l.b16 %v1652
    %v1724 = vunpack.c.l.b16 %v1653
    %v1725 = vunpack.c.l.b16 %v1654
    %v1726 = vunpack.c.l.b16 %v1655
    %v1727 = vunpack.c.l.b16 %v1656
    %v1728 = vunpack.c.l.b16 %v1657
    %v1729 = vunpack.c.l.b16 %v1658
    %v1730 = vunpack.c.l.b16 %v1659
    %v1731 = vunpack.c.l.b16 %v1660
    %v1732 = vunpack.c.l.b16 %v1661
    %v1733 = vunpack.c.l.b16 %v1662
    %v1734 = vunpack.c.l.b16 %v1663
    %v1735 = vunpack.c.l.b16 %v1664
    %v1736 = vunpack.c.l.b16 %v1665
    %v1737 = vunpack.c.l.b16 %v1666
    %v1738 = vunpack.c.l.b16 %v1667
    %v1739 = vunpack.c.l.b16 %v1668
    %v1740 = vunpack.c.l.b16 %v1669
    %v1741 = vunpack.c.l.b16 %v1670
    %v1742 = vunpack.c.l.b16 %v1671
    %v1743 = vunpack.c.l.b16 %v1672
    %v1744 = vunpack.c.l.b16 %v1673
    %v1745 = vunpack.c.l.b16 %v1674
    %v1746 = vunpack.c.l.b16 %v1675
    %v1747 = vunpack.c.l.b16 %v1676
    %v1748 = vunpack.c.l.b16 %v1677
    %v1749 = vunpack.c.l.b16 %v1678
    %v1750 = vunpack.c.l.b16 %v1679
    %v1751 = vunpack.c.l.b16 %v1680
    %v1752 = vunpack.c.l.b16 %v1681
    %v1753 = vpack.c.b16 %v1722, %v1721
    %v1754 = vpack.c.b16 %v1724, %v1723
    %v1755 = vpack.c.b16 %v1726, %v1725
    %v1756 = vpack.c.b16 %v1728, %v1727
    %v1757 = vpack.c.b16 %v1730, %v1729
    %v1758 = vpack.c.b16 %v1732, %v1731
    %v1759 = vpack.c.b16 %v1734, %v1733
    %v1760 = vpack.c.b16 %v1736, %v1735
    %v1761 = vpack.c.b16 %v1738, %v1737
    %v1762 = vpack.c.b16 %v1740, %v1739
    %v1763 = vpack.c.b16 %v1742, %v1741
    %v1764 = vpack.c.b16 %v1744, %v1743
    %v1765 = vpack.c.b16 %v1746, %v1745
    %v1766 = vpack.c.b16 %v1748, %v1747
    %v1767 = vpack.c.b16 %v1750, %v1749
    %v1768 = vpack.c.b16 %v1752, %v1751
    %1785 = vmatprep.subr.bf16.mxu0 0
    %1786 = vmatpush1.bf16.msra.mxu0 %v1753
    %1787 = vmatprep.subr.bf16.mxu0 0
    %1788 = vmatpush1.bf16.msra.mxu0 %v1754
    %1789 = vmatprep.subr.bf16.mxu0 0
    %1790 = vmatpush1.bf16.msra.mxu0 %v1755
    %1791 = vmatprep.subr.bf16.mxu0 0
    %1792 = vmatpush1.bf16.msra.mxu0 %v1756
    %1793 = vmatprep.subr.bf16.mxu0 0
    %1794 = vmatpush1.bf16.msra.mxu0 %v1757
    %1795 = vmatprep.subr.bf16.mxu0 0
    %1796 = vmatpush1.bf16.msra.mxu0 %v1758
    %1797 = vmatprep.subr.bf16.mxu0 0
    %1798 = vmatpush1.bf16.msra.mxu0 %v1759
    %1799 = vmatprep.subr.bf16.mxu0 0
    %1800 = vmatpush1.bf16.msra.mxu0 %v1760
    %1801 = vmatprep.subr.bf16.mxu0 0
    %1802 = vmatpush1.bf16.msra.mxu0 %v1761
    %1803 = vmatprep.subr.bf16.mxu0 0
    %1804 = vmatpush1.bf16.msra.mxu0 %v1762
    %1805 = vmatprep.subr.bf16.mxu0 0
    %1806 = vmatpush1.bf16.msra.mxu0 %v1763
    %1807 = vmatprep.subr.bf16.mxu0 0
    %1808 = vmatpush1.bf16.msra.mxu0 %v1764
    %1809 = vmatprep.subr.bf16.mxu0 0
    %1810 = vmatpush1.bf16.msra.mxu0 %v1765
    %1811 = vmatprep.subr.bf16.mxu0 0
    %1812 = vmatpush1.bf16.msra.mxu0 %v1766
    %1813 = vmatprep.subr.bf16.mxu0 0
    %1814 = vmatpush1.bf16.msra.mxu0 %v1767
    %1815 = vmatprep.subr.bf16.mxu0 0
    %1816 = vmatpush1.bf16.msra.mxu0 %v1768
    %1817 = vmatprep.mubr.bf16.mxu0 %v1649
    %1818 = vmatmul.mubr.bf16.gmra.mrb[0].mxu0 %v1648
    %v1819 = vpop.f32.mrb[0].mxu0
    %v1820 = vadd.f32 %v1687, %v1819
    %v1821 = vpop.f32.mrb[0].mxu0
    %v1822 = vpop.f32.mrb[0].mxu0
    %v1823 = vadd.f32 %v1687, %v1822
    %v1824 = vpop.f32.mrb[0].mxu0
    %1825 = vdwg.mxu0
    %v1826 = vmax.f32 %v1820, 0.0
    %v1827 = vmax.f32 %v1823, 0.0
    %v1828 = vpack.c.bf16 %v1827, %v1826
    %v1829 = vld [vmem:[#allocation13] sm:$0xf]
    %v1830 = vld [vmem:[#allocation13 + $0x4] sm:$0xf]
    %v1831 = vld [vmem:[#allocation13 + $0x8] sm:$0xf]
    %v1832 = vld [vmem:[#allocation13 + $0xc] sm:$0xf]
    %v1833 = vld [vmem:[#allocation13 + $0x10] sm:$0xf]
    %v1834 = vld [vmem:[#allocation13 + $0x14] sm:$0xf]
    %v1835 = vld [vmem:[#allocation13 + $0x18] sm:$0xf]
    %v1836 = vld [vmem:[#allocation13 + $0x1c] sm:$0xf]
    %v1837 = vld [vmem:[#allocation13 + $0x20] sm:$0xf]
    %v1838 = vld [vmem:[#allocation13 + $0x24] sm:$0xf]
    %v1839 = vld [vmem:[#allocation13 + $0x28] sm:$0xf]
    %v1840 = vld [vmem:[#allocation13 + $0x2c] sm:$0xf]
    %v1841 = vld [vmem:[#allocation13 + $0x30] sm:$0xf]
    %v1842 = vld [vmem:[#allocation13 + $0x34] sm:$0xf]
    %v1843 = vld [vmem:[#allocation13 + $0x38] sm:$0xf]
    %v1844 = vld [vmem:[#allocation13 + $0x3c] sm:$0xf]
    %v1845 = vld [vmem:[%s12] sm:$0x1]
    %v1847 = vlaneseq
    %v1848 = vshrl.u32 %v1847, 7
    %v1849 = vsub.s32 0, %v1848
    %v1850 = vrot.slane %v1845, %v1849
    %v1868 = vunpack.c.l.b16 %v1829
    %v1869 = vunpack.c.l.b16 %v1830
    %v1870 = vunpack.c.l.b16 %v1831
    %v1871 = vunpack.c.l.b16 %v1832
    %v1872 = vunpack.c.l.b16 %v1833
    %v1873 = vunpack.c.l.b16 %v1834
    %v1874 = vunpack.c.l.b16 %v1835
    %v1875 = vunpack.c.l.b16 %v1836
    %v1876 = vunpack.c.l.b16 %v1837
    %v1877 = vunpack.c.l.b16 %v1838
    %v1878 = vunpack.c.l.b16 %v1839
    %v1879 = vunpack.c.l.b16 %v1840
    %v1880 = vunpack.c.l.b16 %v1841
    %v1881 = vunpack.c.l.b16 %v1842
    %v1882 = vunpack.c.l.b16 %v1843
    %v1883 = vunpack.c.l.b16 %v1844
    %v1884 = vpack.c.b16 %v1869, %v1868
    %v1885 = vpack.c.b16 %v1871, %v1870
    %v1886 = vpack.c.b16 %v1873, %v1872
    %v1887 = vpack.c.b16 %v1875, %v1874
    %v1888 = vpack.c.b16 %v1877, %v1876
    %v1889 = vpack.c.b16 %v1879, %v1878
    %v1890 = vpack.c.b16 %v1881, %v1880
    %v1891 = vpack.c.b16 %v1883, %v1882
    %1900 = vmatprep.subr.bf16.mxu0 0
    %1901 = vmatpush1.bf16.msra.mxu0 %v1884
    %1902 = vmatprep.subr.bf16.mxu0 0
    %1903 = vmatpush1.bf16.msra.mxu0 %v1885
    %1904 = vmatprep.subr.bf16.mxu0 0
    %1905 = vmatpush1.bf16.msra.mxu0 %v1886
    %1906 = vmatprep.subr.bf16.mxu0 0
    %1907 = vmatpush1.bf16.msra.mxu0 %v1887
    %1908 = vmatprep.subr.bf16.mxu0 0
    %1909 = vmatpush1.bf16.msra.mxu0 %v1888
    %1910 = vmatprep.subr.bf16.mxu0 0
    %1911 = vmatpush1.bf16.msra.mxu0 %v1889
    %1912 = vmatprep.subr.bf16.mxu0 0
    %1913 = vmatpush1.bf16.msra.mxu0 %v1890
    %1914 = vmatprep.subr.bf16.mxu0 0
    %1915 = vmatpush1.bf16.msra.mxu0 %v1891
    %1916 = vmatprep.subr.bf16.mxu0 0
    %1917 = vmatpush1.bf16.msra.mxu0 0
    %1918 = vmatprep.subr.bf16.mxu0 0
    %1919 = vmatpush1.bf16.msra.mxu0 0
    %1920 = vmatprep.subr.bf16.mxu0 0
    %1921 = vmatpush1.bf16.msra.mxu0 0
    %1922 = vmatprep.subr.bf16.mxu0 0
    %1923 = vmatpush1.bf16.msra.mxu0 0
    %1924 = vmatprep.subr.bf16.mxu0 0
    %1925 = vmatpush1.bf16.msra.mxu0 0
    %1926 = vmatprep.subr.bf16.mxu0 0
    %1927 = vmatpush1.bf16.msra.mxu0 0
    %1928 = vmatprep.subr.bf16.mxu0 0
    %1929 = vmatpush1.bf16.msra.mxu0 0
    %1930 = vmatprep.subr.bf16.mxu0 0
    %1931 = vmatpush1.bf16.msra.mxu0 0
    %1932 = vmatprep.mubr.bf16.mxu0 0
    %1933 = vmatmul.mubr.bf16.gmra.mrb[0].mxu0 %v1828
    %v1934 = vpop.f32.mrb[0].mxu0
    %v1935 = vadd.f32 %v1850, %v1934
    %v1936 = vpop.f32.mrb[0].mxu0
    %v1937 = vpop.f32.mrb[0].mxu0
    %v1938 = vadd.f32 %v1850, %v1937
    %v1939 = vpop.f32.mrb[0].mxu0
    %1940 = vdwg.mxu0
    %v1941 = vpack.c.bf16 %v1938, %v1935
    %v1943 = vunpack.c.l.b16 %v1941
    %v1944 = vunpack.c.h.b16 %v1941
    %v1945 = vpack.c.b16 %v1943, %v1943
    %v1946 = vpack.c.b16 %v1944, %v1944
    %1949 = vst [vmem:[#allocation14] sm:$0xf] %v1945
    %1950 = vst [vmem:[#allocation14 + $0x4] sm:$0xf] %v1946
    // Predicated region
    $region82: #{tpu_custom_call.1} parent=1 // pred_check
      _
    $region83: #{tpu_custom_call.1} parent=1 // pred_check_branch
      %1952 = sbr.rel (0) target = $region85
    $region84: #{tpu_custom_call.1} parent=1 // pred_region
      %s1954 = ssub.s32 128, 128
      %1955 = vsyncadd [#allocation4], %s1954
      %s1956 = sshll.u32 [#allocation14], 4
      %s1957 = int_to_ptr.vmem [resolvable:$true] %s1956
      %1962 = dma.vmem_to_hbm [thread:$0]  %s1957, 128, %s13, [#allocation4], 64, 64, 4
    $region85: #{tpu_custom_call.1} parent=1 // pred_fallthru
      _
    // Predicated region
    $region86: #{tpu_custom_call.1} parent=1 // pred_check
      _
    $region87: #{tpu_custom_call.1} parent=1 // pred_check_branch
      %1964 = sbr.rel (0) target = $region89
    $region88: #{tpu_custom_call.1} parent=1 // pred_region
      %1965 = dma.done [#allocation4], 128
    $region89: #{tpu_custom_call.1} parent=1 // pred_fallthru
      _
    %1966 = vsyncpa [#allocation3], 1
    %1967 = vsyncpa [#allocation6], 1
    %1968 = vsyncpa [#allocation9], 1
    %1969 = vsyncpa [#allocation12], 1
    %1970 = vsyncpa [#allocation4], 1

</llo_original>
